<compile_context>
chip_gen: v7x
topology: tpu7x:2x2x1
jax: 0.10.0
libtpu: 0.0.40
codegen_flags: <defaults>
</compile_context>

<pallas_src>
import functools

import jax
import jax.numpy as jnp
from jax.experimental import pallas as pl
from jax.experimental.pallas import tpu as pltpu


def _nonlocal_kernel(target_ref, refp_ref, refap_ref,
                     w_theta_ref, b_theta_ref,
                     w_phi_ref, b_phi_ref,
                     w_g_ref, b_g_ref,
                     w_W_ref, b_W_ref,
                     z_ref, y_ref, *, m):
    # target_ref: (1, C, N); refp_ref: (1, 4M, C); refap_ref: (1, C, 4M)
    # w_theta/w_g: (Ci, C), w_phi: (C, Ci), w_W: (C, Ci)
    # b_theta/b_g: (Ci, 1), b_phi: (1, Ci), b_W: (C, 1)
    tgt = target_ref[0]                                                   # (C, N)

    # theta (1/N attention scale already folded into weights + bias)
    theta = jnp.dot(w_theta_ref[...], tgt,
                    preferred_element_type=jnp.float32) + b_theta_ref[...]  # (Ci, N)

    # phi: one fused 1x1-conv matmul over all 4 pool-window positions (channels-last),
    # 2x2 MaxPool == max over the 4 contiguous position chunks, bias added once.
    phi_full = jnp.dot(refp_ref[0], w_phi_ref[...],
                       preferred_element_type=jnp.float32)                 # (4M, Ci)
    phi = jnp.maximum(jnp.maximum(phi_full[0 * m:1 * m], phi_full[1 * m:2 * m]),
                      jnp.maximum(phi_full[2 * m:3 * m], phi_full[3 * m:4 * m]))
    phi = phi + b_phi_ref[...]                                             # (M, Ci)

    # g: same fused conv + pool, but channels-first so y^T = g @ s^T is a plain NN dot.
    g_full = jnp.dot(w_g_ref[...], refap_ref[0],
                     preferred_element_type=jnp.float32)                   # (Ci, 4M)
    g = jnp.maximum(jnp.maximum(g_full[:, 0 * m:1 * m], g_full[:, 1 * m:2 * m]),
                    jnp.maximum(g_full[:, 2 * m:3 * m], g_full[:, 3 * m:4 * m]))
    g = g + b_g_ref[...]                                                   # (Ci, M)

    # s^T = phi @ theta  (scale folded into theta);  y^T = g @ s^T
    s_t = jnp.dot(phi, theta, preferred_element_type=jnp.float32)          # (M, N)
    y_t = jnp.dot(g, s_t, preferred_element_type=jnp.float32)              # (Ci, N)

    # W 1x1 conv + residual, channels-first -> lane-dense (C, N) output store.
    w_y = jnp.dot(w_W_ref[...], y_t,
                  preferred_element_type=jnp.float32) + b_W_ref[...]       # (C, N)
    z_ref[0] = w_y + tgt
    y_ref[0] = y_t


def nonlocal_forward(target, ref, ref_align, params):
    """target/ref/ref_align are NCHW float32 (matches the PyTorch module).

    Returns (z in NCHW, y in (b, Ci, N)) — the module itself returns only z; y is
    kept as a second lane-dense output for verification.
    """
    b, c, h, w = target.shape
    n = h * w
    m = n // 4
    ci = params["w_theta"].shape[1]
    inv_n = 1.0 / n

    # Free reshape of NCHW: channels-first flat pixels (no HBM transpose).
    target_f = target.reshape(b, c, n)

    # Repack ref/ref_align so the four 2x2 pool-window positions are contiguous
    # chunks (position-major); this single cheap repack lets the kernel do one fused
    # conv matmul per tensor and pool via contiguous-slice maxima.
    def win4_channels_last(x):                      # -> (b, 4M, C)
        x = x.reshape(b, c, h // 2, 2, w // 2, 2)
        x = jnp.transpose(x, (0, 3, 5, 2, 4, 1))    # (b, dr, dc, i, j, c)
        return x.reshape(b, 4 * m, c)

    def win4_channels_first(x):                     # -> (b, C, 4M)
        x = x.reshape(b, c, h // 2, 2, w // 2, 2)
        x = jnp.transpose(x, (0, 1, 3, 5, 2, 4))    # (b, c, dr, dc, i, j)
        return x.reshape(b, c, 4 * m)

    refp = win4_channels_last(ref)
    refap = win4_channels_first(ref_align)

    # Channels-first weights; fold the 1/N attention scale into theta.
    w_theta_cf = (params["w_theta"] * inv_n).T          # (Ci, C)
    b_theta_cf = (params["b_theta"] * inv_n).reshape(-1, 1)   # (Ci, 1)
    w_phi_cl = params["w_phi"]                          # (C, Ci)  (channels-last use)
    b_phi_cl = params["b_phi"].reshape(1, -1)           # (1, Ci)
    w_g_cf = params["w_g"].T                            # (Ci, C)
    b_g_cf = params["b_g"].reshape(-1, 1)               # (Ci, 1)
    w_W_cf = params["w_W"].T                            # (C, Ci)
    b_W_cf = params["b_W"].reshape(-1, 1)               # (C, 1)

    def batched(shape):
        nd = len(shape)
        return pl.BlockSpec((1,) + shape, lambda i, _nd=nd: (i,) + (0,) * _nd)

    def const(shape):
        nd = len(shape)
        return pl.BlockSpec(shape, lambda i, _nd=nd: (0,) * _nd)

    # Grid over batch; "parallel" lets v7x's two TensorCores split the batch, and on
    # single-TC v5e/v6e the per-step overhead at b=2 is negligible.
    # Note: for large h*w, the query-pixel axis (N) of theta/s/y/z should additionally
    # be tiled flash-style so s^T (M, N) never has to fit in VMEM at once.
    z, y = pl.pallas_call(
        functools.partial(_nonlocal_kernel, m=m),
        out_shape=(jax.ShapeDtypeStruct((b, c, n), jnp.float32),
                   jax.ShapeDtypeStruct((b, ci, n), jnp.float32)),
        grid=(b,),
        in_specs=[batched((c, n)), batched((4 * m, c)), batched((c, 4 * m)),
                  const((ci, c)), const((ci, 1)),
                  const((c, ci)), const((1, ci)),
                  const((ci, c)), const((ci, 1)),
                  const((c, ci)), const((c, 1))],
        out_specs=(batched((c, n)), batched((ci, n))),
        compiler_params=pltpu.CompilerParams(dimension_semantics=("parallel",)),
    )(target_f, refp, refap,
      w_theta_cf, b_theta_cf, w_phi_cl, b_phi_cl, w_g_cf, b_g_cf, w_W_cf, b_W_cf)

    z_nchw = z.reshape(b, c, h, w)                  # free reshape back to NCHW
    return z_nchw, y


def nonlocal_reference(target, ref, ref_align, params):
    """Plain-JAX reference mirroring the PyTorch forward (for verification)."""
    b, c, h, w = target.shape
    n = h * w
    hi = jax.lax.Precision.HIGHEST

    def conv1x1(x, wmat, bvec):                     # x NCHW, wmat (C_in, C_out)
        return jnp.einsum("bchw,co->bohw", x, wmat, precision=hi) \
            + bvec.reshape(1, -1, 1, 1)

    def pool(x):                                    # MaxPool2d(2, 2)
        bb, cc, hh, ww = x.shape
        return x.reshape(bb, cc, hh // 2, 2, ww // 2, 2).max(axis=(3, 5))

    phi = pool(conv1x1(ref, params["w_phi"], params["b_phi"][0])).reshape(b, -1, n // 4)
    g = pool(conv1x1(ref_align, params["w_g"], params["b_g"][0])).reshape(b, -1, n // 4)
    theta = conv1x1(target, params["w_theta"], params["b_theta"][0]).reshape(b, -1, n)
    s = jnp.matmul(jnp.swapaxes(theta, -2, -1), phi, precision=hi) / n
    y = jnp.matmul(s, jnp.swapaxes(g, -2, -1), precision=hi)        # (b, N, Ci)
    y_img = jnp.swapaxes(y, -2, -1).reshape(b, -1, h, w)
    w_y = conv1x1(y_img, params["w_W"], params["b_W"][0])
    return w_y + target, y


if __name__ == "__main__":
    b, c, ci, h, w = 2, 4, 2, 16, 16          # in_channel=4, inter_channels=2
    key = jax.random.PRNGKey(0)
    keys = jax.random.split(key, 11)

    target = jax.random.normal(keys[0], (b, c, h, w), jnp.float32)
    ref = jax.random.normal(keys[1], (b, c, h, w), jnp.float32)
    ref_align = jax.random.normal(keys[2], (b, c, h, w), jnp.float32)

    # Non-zero W so the W-conv path of the kernel is actually exercised numerically.
    params = {
        "w_theta": jax.random.normal(keys[3], (c, ci), jnp.float32) * 0.1,
        "b_theta": jax.random.normal(keys[4], (1, ci), jnp.float32) * 0.1,
        "w_phi": jax.random.normal(keys[5], (c, ci), jnp.float32) * 0.1,
        "b_phi": jax.random.normal(keys[6], (1, ci), jnp.float32) * 0.1,
        "w_g": jax.random.normal(keys[7], (c, ci), jnp.float32) * 0.1,
        "b_g": jax.random.normal(keys[8], (1, ci), jnp.float32) * 0.1,
        "w_W": jax.random.normal(keys[9], (ci, c), jnp.float32) * 0.1,
        "b_W": jax.random.normal(keys[10], (1, c), jnp.float32) * 0.1,
    }

    z, y = nonlocal_forward(target, ref, ref_align, params)
    jax.block_until_ready((z, y))

    z_exp, y_exp = nonlocal_reference(target, ref, ref_align, params)
    assert z.shape == (b, c, h, w)
    assert jnp.allclose(y, jnp.swapaxes(y_exp, 1, 2), atol=1e-4, rtol=1e-4), \
        "nonlocal y mismatch"
    assert jnp.allclose(z, z_exp, atol=1e-4, rtol=1e-4), "output z mismatch"

    # Also check the PyTorch module's actual init (W == 0 => z == target).
    params_init = dict(params, w_W=jnp.zeros((ci, c), jnp.float32),
                       b_W=jnp.zeros((1, c), jnp.float32))
    z0, _ = nonlocal_forward(target, ref, ref_align, params_init)
    jax.block_until_ready(z0)
    assert jnp.allclose(z0, target, atol=1e-5, rtol=1e-5), "zero-init W residual mismatch"

    print("KERNEL_OK")
</pallas_src>

<mosaic_0001>
module attributes {stable_mosaic.version = 11 : i64} {
  func.func @_nonlocal_kernel(%arg0: i32, %arg1: memref<1x4x256xf32, #tpu.memory_space<vmem>>, %arg2: memref<1x256x4xf32, #tpu.memory_space<vmem>>, %arg3: memref<1x4x256xf32, #tpu.memory_space<vmem>>, %arg4: memref<2x4xf32, #tpu.memory_space<vmem>>, %arg5: memref<2x1xf32, #tpu.memory_space<vmem>>, %arg6: memref<4x2xf32, #tpu.memory_space<vmem>>, %arg7: memref<1x2xf32, #tpu.memory_space<vmem>>, %arg8: memref<2x4xf32, #tpu.memory_space<vmem>>, %arg9: memref<2x1xf32, #tpu.memory_space<vmem>>, %arg10: memref<4x2xf32, #tpu.memory_space<vmem>>, %arg11: memref<4x1xf32, #tpu.memory_space<vmem>>, %arg12: memref<1x4x256xf32, #tpu.memory_space<vmem>>, %arg13: memref<1x2x256xf32, #tpu.memory_space<vmem>>) attributes {dimension_semantics = [#tpu.dimension_semantics<parallel>], iteration_bounds = array<i64: 2>, scalar_prefetch = 0 : i64, scratch_operands = 0 : i64, tpu.core_type = #tpu.core_type<tc>, window_params = [{transform_indices = @transform_0, window_bounds = array<i64: 1, 4, 256>}, {transform_indices = @transform_1, window_bounds = array<i64: 1, 256, 4>}, {transform_indices = @transform_2, window_bounds = array<i64: 1, 4, 256>}, {pipeline_mode = #tpu.pipeline_mode<synchronous>, transform_indices = @transform_3, window_bounds = array<i64: 2, 4>}, {pipeline_mode = #tpu.pipeline_mode<synchronous>, transform_indices = @transform_4, window_bounds = array<i64: 2, 1>}, {pipeline_mode = #tpu.pipeline_mode<synchronous>, transform_indices = @transform_5, window_bounds = array<i64: 4, 2>}, {pipeline_mode = #tpu.pipeline_mode<synchronous>, transform_indices = @transform_6, window_bounds = array<i64: 1, 2>}, {pipeline_mode = #tpu.pipeline_mode<synchronous>, transform_indices = @transform_7, window_bounds = array<i64: 2, 4>}, {pipeline_mode = #tpu.pipeline_mode<synchronous>, transform_indices = @transform_8, window_bounds = array<i64: 2, 1>}, {pipeline_mode = #tpu.pipeline_mode<synchronous>, transform_indices = @transform_9, window_bounds = array<i64: 4, 2>}, {pipeline_mode = #tpu.pipeline_mode<synchronous>, transform_indices = @transform_10, window_bounds = array<i64: 4, 1>}, {transform_indices = @transform_11, window_bounds = array<i64: 1, 4, 256>}, {transform_indices = @transform_12, window_bounds = array<i64: 1, 2, 256>}]} {
    %c0 = arith.constant 0 : index
    %c0_0 = arith.constant 0 : index
    %c0_1 = arith.constant 0 : index
    %0 = vector.load %arg1[%c0, %c0_0, %c0_1] : memref<1x4x256xf32, #tpu.memory_space<vmem>>, vector<1x4x256xf32>
    %1 = vector.shape_cast %0 : vector<1x4x256xf32> to vector<4x256xf32>
    %c0_2 = arith.constant 0 : index
    %c0_3 = arith.constant 0 : index
    %2 = vector.load %arg4[%c0_2, %c0_3] : memref<2x4xf32, #tpu.memory_space<vmem>>, vector<2x4xf32>
    %cst = arith.constant dense<0.000000e+00> : vector<2x256xf32>
    %3 = tpu.matmul %2, %1, %cst {dimension_numbers = #tpu.dot_dimension_numbers<[1], [0], [0], [1], [0, 0, 1, 1], [], []>} : vector<2x4xf32>, vector<4x256xf32>, vector<2x256xf32> -> vector<2x256xf32>
    %c0_4 = arith.constant 0 : index
    %c0_5 = arith.constant 0 : index
    %4 = vector.load %arg5[%c0_4, %c0_5] : memref<2x1xf32, #tpu.memory_space<vmem>>, vector<2x1xf32>
    %5 = vector.broadcast %4 : vector<2x1xf32> to vector<2x256xf32>
    %6 = arith.addf %3, %5 : vector<2x256xf32>
    %c0_6 = arith.constant 0 : index
    %c0_7 = arith.constant 0 : index
    %c0_8 = arith.constant 0 : index
    %7 = vector.load %arg2[%c0_6, %c0_7, %c0_8] : memref<1x256x4xf32, #tpu.memory_space<vmem>>, vector<1x256x4xf32>
    %8 = vector.shape_cast %7 : vector<1x256x4xf32> to vector<256x4xf32>
    %c0_9 = arith.constant 0 : index
    %c0_10 = arith.constant 0 : index
    %9 = vector.load %arg6[%c0_9, %c0_10] : memref<4x2xf32, #tpu.memory_space<vmem>>, vector<4x2xf32>
    %cst_11 = arith.constant dense<0.000000e+00> : vector<256x2xf32>
    %10 = tpu.matmul %8, %9, %cst_11 {dimension_numbers = #tpu.dot_dimension_numbers<[1], [0], [0], [1], [0, 0, 1, 1], [], []>} : vector<256x4xf32>, vector<4x2xf32>, vector<256x2xf32> -> vector<256x2xf32>
    %11 = vector.extract_strided_slice %10 {offsets = [0, 0], sizes = [64, 2], strides = [1, 1]} : vector<256x2xf32> to vector<64x2xf32>
    %12 = vector.extract_strided_slice %10 {offsets = [64, 0], sizes = [64, 2], strides = [1, 1]} : vector<256x2xf32> to vector<64x2xf32>
    %13 = arith.maximumf %11, %12 : vector<64x2xf32>
    %14 = vector.extract_strided_slice %10 {offsets = [128, 0], sizes = [64, 2], strides = [1, 1]} : vector<256x2xf32> to vector<64x2xf32>
    %15 = vector.extract_strided_slice %10 {offsets = [192, 0], sizes = [64, 2], strides = [1, 1]} : vector<256x2xf32> to vector<64x2xf32>
    %16 = arith.maximumf %14, %15 : vector<64x2xf32>
    %17 = arith.maximumf %13, %16 : vector<64x2xf32>
    %c0_12 = arith.constant 0 : index
    %c0_13 = arith.constant 0 : index
    %18 = vector.load %arg7[%c0_12, %c0_13] : memref<1x2xf32, #tpu.memory_space<vmem>>, vector<1x2xf32>
    %19 = vector.broadcast %18 : vector<1x2xf32> to vector<64x2xf32>
    %20 = arith.addf %17, %19 : vector<64x2xf32>
    %c0_14 = arith.constant 0 : index
    %c0_15 = arith.constant 0 : index
    %21 = vector.load %arg8[%c0_14, %c0_15] : memref<2x4xf32, #tpu.memory_space<vmem>>, vector<2x4xf32>
    %c0_16 = arith.constant 0 : index
    %c0_17 = arith.constant 0 : index
    %c0_18 = arith.constant 0 : index
    %22 = vector.load %arg3[%c0_16, %c0_17, %c0_18] : memref<1x4x256xf32, #tpu.memory_space<vmem>>, vector<1x4x256xf32>
    %23 = vector.shape_cast %22 : vector<1x4x256xf32> to vector<4x256xf32>
    %cst_19 = arith.constant dense<0.000000e+00> : vector<2x256xf32>
    %24 = tpu.matmul %21, %23, %cst_19 {dimension_numbers = #tpu.dot_dimension_numbers<[1], [0], [0], [1], [0, 0, 1, 1], [], []>} : vector<2x4xf32>, vector<4x256xf32>, vector<2x256xf32> -> vector<2x256xf32>
    %25 = vector.extract_strided_slice %24 {offsets = [0, 0], sizes = [2, 64], strides = [1, 1]} : vector<2x256xf32> to vector<2x64xf32>
    %26 = vector.extract_strided_slice %24 {offsets = [0, 64], sizes = [2, 64], strides = [1, 1]} : vector<2x256xf32> to vector<2x64xf32>
    %27 = arith.maximumf %25, %26 : vector<2x64xf32>
    %28 = vector.extract_strided_slice %24 {offsets = [0, 128], sizes = [2, 64], strides = [1, 1]} : vector<2x256xf32> to vector<2x64xf32>
    %29 = vector.extract_strided_slice %24 {offsets = [0, 192], sizes = [2, 64], strides = [1, 1]} : vector<2x256xf32> to vector<2x64xf32>
    %30 = arith.maximumf %28, %29 : vector<2x64xf32>
    %31 = arith.maximumf %27, %30 : vector<2x64xf32>
    %c0_20 = arith.constant 0 : index
    %c0_21 = arith.constant 0 : index
    %32 = vector.load %arg9[%c0_20, %c0_21] : memref<2x1xf32, #tpu.memory_space<vmem>>, vector<2x1xf32>
    %33 = vector.broadcast %32 : vector<2x1xf32> to vector<2x64xf32>
    %34 = arith.addf %31, %33 : vector<2x64xf32>
    %cst_22 = arith.constant dense<0.000000e+00> : vector<64x256xf32>
    %35 = tpu.matmul %20, %6, %cst_22 {dimension_numbers = #tpu.dot_dimension_numbers<[1], [0], [0], [1], [0, 0, 1, 1], [], []>} : vector<64x2xf32>, vector<2x256xf32>, vector<64x256xf32> -> vector<64x256xf32>
    %cst_23 = arith.constant dense<0.000000e+00> : vector<2x256xf32>
    %36 = tpu.matmul %34, %35, %cst_23 {dimension_numbers = #tpu.dot_dimension_numbers<[1], [0], [0], [1], [0, 0, 1, 1], [], []>} : vector<2x64xf32>, vector<64x256xf32>, vector<2x256xf32> -> vector<2x256xf32>
    %c0_24 = arith.constant 0 : index
    %c0_25 = arith.constant 0 : index
    %37 = vector.load %arg10[%c0_24, %c0_25] : memref<4x2xf32, #tpu.memory_space<vmem>>, vector<4x2xf32>
    %cst_26 = arith.constant dense<0.000000e+00> : vector<4x256xf32>
    %38 = tpu.matmul %37, %36, %cst_26 {dimension_numbers = #tpu.dot_dimension_numbers<[1], [0], [0], [1], [0, 0, 1, 1], [], []>} : vector<4x2xf32>, vector<2x256xf32>, vector<4x256xf32> -> vector<4x256xf32>
    %c0_27 = arith.constant 0 : index
    %c0_28 = arith.constant 0 : index
    %39 = vector.load %arg11[%c0_27, %c0_28] : memref<4x1xf32, #tpu.memory_space<vmem>>, vector<4x1xf32>
    %40 = vector.broadcast %39 : vector<4x1xf32> to vector<4x256xf32>
    %41 = arith.addf %38, %40 : vector<4x256xf32>
    %42 = arith.addf %41, %1 : vector<4x256xf32>
    %c0_29 = arith.constant 0 : index
    %c0_30 = arith.constant 0 : index
    %c0_31 = arith.constant 0 : index
    %43 = vector.load %arg12[%c0_29, %c0_30, %c0_31] : memref<1x4x256xf32, #tpu.memory_space<vmem>>, vector<1x4x256xf32>
    %44 = vector.shape_cast %43 : vector<1x4x256xf32> to vector<4x256xf32>
    %45 = vector.shape_cast %42 : vector<4x256xf32> to vector<1x4x256xf32>
    tpu.vector_store %arg12[%c0_29, %c0_30, %c0_31], %45 {strides = array<i32>} : memref<1x4x256xf32, #tpu.memory_space<vmem>>, vector<1x4x256xf32>,
    %c0_32 = arith.constant 0 : index
    %c0_33 = arith.constant 0 : index
    %c0_34 = arith.constant 0 : index
    %46 = vector.load %arg13[%c0_32, %c0_33, %c0_34] : memref<1x2x256xf32, #tpu.memory_space<vmem>>, vector<1x2x256xf32>
    %47 = vector.shape_cast %46 : vector<1x2x256xf32> to vector<2x256xf32>
    %48 = vector.shape_cast %36 : vector<2x256xf32> to vector<1x2x256xf32>
    tpu.vector_store %arg13[%c0_32, %c0_33, %c0_34], %48 {strides = array<i32>} : memref<1x2x256xf32, #tpu.memory_space<vmem>>, vector<1x2x256xf32>,
    return
  }
  func.func @transform_0(%arg0: i32) -> (i32, i32, i32) {
    %c0_i32 = arith.constant 0 : i32
    %c0_i32_0 = arith.constant 0 : i32
    %c0_i32_1 = arith.constant 0 : i32
    return %arg0, %c0_i32, %c0_i32_0 : i32, i32, i32
  }
  func.func @transform_1(%arg0: i32) -> (i32, i32, i32) {
    %c0_i32 = arith.constant 0 : i32
    %c0_i32_0 = arith.constant 0 : i32
    %c0_i32_1 = arith.constant 0 : i32
    return %arg0, %c0_i32, %c0_i32_0 : i32, i32, i32
  }
  func.func @transform_2(%arg0: i32) -> (i32, i32, i32) {
    %c0_i32 = arith.constant 0 : i32
    %c0_i32_0 = arith.constant 0 : i32
    %c0_i32_1 = arith.constant 0 : i32
    return %arg0, %c0_i32, %c0_i32_0 : i32, i32, i32
  }
  func.func @transform_3(%arg0: i32) -> (i32, i32) {
    %c0_i32 = arith.constant 0 : i32
    %c0_i32_0 = arith.constant 0 : i32
    %c0_i32_1 = arith.constant 0 : i32
    return %c0_i32, %c0_i32_0 : i32, i32
  }
  func.func @transform_4(%arg0: i32) -> (i32, i32) {
    %c0_i32 = arith.constant 0 : i32
    %c0_i32_0 = arith.constant 0 : i32
    %c0_i32_1 = arith.constant 0 : i32
    return %c0_i32, %c0_i32_0 : i32, i32
  }
  func.func @transform_5(%arg0: i32) -> (i32, i32) {
    %c0_i32 = arith.constant 0 : i32
    %c0_i32_0 = arith.constant 0 : i32
    %c0_i32_1 = arith.constant 0 : i32
    return %c0_i32, %c0_i32_0 : i32, i32
  }
  func.func @transform_6(%arg0: i32) -> (i32, i32) {
    %c0_i32 = arith.constant 0 : i32
    %c0_i32_0 = arith.constant 0 : i32
    %c0_i32_1 = arith.constant 0 : i32
    return %c0_i32, %c0_i32_0 : i32, i32
  }
  func.func @transform_7(%arg0: i32) -> (i32, i32) {
    %c0_i32 = arith.constant 0 : i32
    %c0_i32_0 = arith.constant 0 : i32
    %c0_i32_1 = arith.constant 0 : i32
    return %c0_i32, %c0_i32_0 : i32, i32
  }
  func.func @transform_8(%arg0: i32) -> (i32, i32) {
    %c0_i32 = arith.constant 0 : i32
    %c0_i32_0 = arith.constant 0 : i32
    %c0_i32_1 = arith.constant 0 : i32
    return %c0_i32, %c0_i32_0 : i32, i32
  }
  func.func @transform_9(%arg0: i32) -> (i32, i32) {
    %c0_i32 = arith.constant 0 : i32
    %c0_i32_0 = arith.constant 0 : i32
    %c0_i32_1 = arith.constant 0 : i32
    return %c0_i32, %c0_i32_0 : i32, i32
  }
  func.func @transform_10(%arg0: i32) -> (i32, i32) {
    %c0_i32 = arith.constant 0 : i32
    %c0_i32_0 = arith.constant 0 : i32
    %c0_i32_1 = arith.constant 0 : i32
    return %c0_i32, %c0_i32_0 : i32, i32
  }
  func.func @transform_11(%arg0: i32) -> (i32, i32, i32) {
    %c0_i32 = arith.constant 0 : i32
    %c0_i32_0 = arith.constant 0 : i32
    %c0_i32_1 = arith.constant 0 : i32
    return %arg0, %c0_i32, %c0_i32_0 : i32, i32, i32
  }
  func.func @transform_12(%arg0: i32) -> (i32, i32, i32) {
    %c0_i32 = arith.constant 0 : i32
    %c0_i32_0 = arith.constant 0 : i32
    %c0_i32_1 = arith.constant 0 : i32
    return %arg0, %c0_i32, %c0_i32_0 : i32, i32, i32
  }
}

</mosaic_0001>

<llo_original>
// kernel: tpu_custom_call.1
$region0: #{tpu_custom_call.1}
  #allocation0 [shape = 'u32[]', space=smem, size = 0x4, offset = 0x4, fixed_abs, tag = 'smem constant byte address 0x4 - core index']
  #allocation1 [shape = 'u32[144,128]{1,0:T(1,128)}', space=vmem, size = 0x12000, scoped, tag = 'internal scratch']
  %s0 = inlined_call_operand.vmem [shape: f32[2,4,256], index: 0, kind: input, shape index: {}]
  %s1 = inlined_call_operand.vmem [shape: f32[2,256,4], index: 1, kind: input, shape index: {}]
  %s2 = inlined_call_operand.vmem [shape: f32[2,4,256], index: 2, kind: input, shape index: {}]
  %s3 = inlined_call_operand.vmem [shape: f32[2,4], index: 3, kind: input, shape index: {}]
  %s4 = inlined_call_operand.vmem [shape: f32[2,1], index: 4, kind: input, shape index: {}]
  %s5 = inlined_call_operand.vmem [shape: f32[4,2], index: 5, kind: input, shape index: {}]
  %s6 = inlined_call_operand.vmem [shape: f32[1,2], index: 6, kind: input, shape index: {}]
  %s7 = inlined_call_operand.vmem [shape: f32[2,4], index: 7, kind: input, shape index: {}]
  %s8 = inlined_call_operand.vmem [shape: f32[2,1], index: 8, kind: input, shape index: {}]
  %s9 = inlined_call_operand.vmem [shape: f32[4,2], index: 9, kind: input, shape index: {}]
  %s10 = inlined_call_operand.vmem [shape: f32[4,1], index: 10, kind: input, shape index: {}]
  %s11 = inlined_call_operand.hbm [shape: f32[2,4,256], index: 11, kind: output, shape index: {0}]
  %s12 = inlined_call_operand.hbm [shape: f32[2,2,256], index: 12, kind: output, shape index: {1}]
  %13 = xla_tuple %s11, %s12
  %s14 = sld [smem:[#allocation0]]
  $region85: #{tpu_custom_call.1} parent=0
    _
  %s16 = ssub.s32 1, %s14
  %s17 = scalar_select 0, %s16, %s14
  $region1: #{tpu_custom_call.1} parent=0
    #allocation2 [shape = 'u8[8192]{0}', space=vmem, size = 0x2000, scoped, tag = 'output window, operand 0']
    #allocation3 [shape = 's32[2]{0}', space=sflag, size = 0x8, scoped, tag = 'scoped memory for tpu_custom_call.1']
    #allocation4 [shape = 'u8[4096]{0}', space=vmem, size = 0x1000, scoped, tag = 'output window, operand 1']
    #allocation5 [shape = 's32[2]{0}', space=sflag, size = 0x8, scoped, tag = 'scoped memory for tpu_custom_call.1']
    %18 = vsyncpa [#allocation3], 0
    %s19 = scalar_lea.sflag [#allocation3], 1
    %20 = vsyncpa %s19, 0
    %21 = vsyncpa [#allocation5], 0
    %s22 = scalar_lea.sflag [#allocation5], 1
    %23 = vsyncpa %s22, 0
    loop: start=0, step=1, limit=4
    $region2: #{tpu_custom_call.1} parent=1 // loop_pre_header
      _
    $region3: #{tpu_custom_call.1} parent=1 // loop_header
      %s25 = sphi 0, %s29
      %p26 = scmp.ge.s32.totalorder %s25, 4
      %s35 = sphi 0, %s37
      %s38 = sphi 0, %s35
      %s39 = sphi 0, %s38
      %s55 = sphi 0, %s39
      %s61 = sphi 0, %s63
      %s64 = sphi 0, %s61
      %s65 = sphi 0, %s64
      %s81 = sphi 0, %s65
      %s87 = sphi 0, %s89
      %s90 = sphi 0, %s87
      %s91 = sphi 0, %s90
      %s107 = sphi 0, %s91
      %s111 = sphi 0, %s111
      %s113 = sphi 0, %s111
      %s114 = sphi 0, %s113
      %s128 = sphi 0, %s114
      %s132 = sphi 0, %s132
      %s134 = sphi 0, %s132
      %s135 = sphi 0, %s134
      %s149 = sphi 0, %s135
      %s153 = sphi 0, %s153
      %s155 = sphi 0, %s153
      %s156 = sphi 0, %s155
      %s170 = sphi 0, %s156
      %s174 = sphi 0, %s174
      %s176 = sphi 0, %s174
      %s177 = sphi 0, %s176
      %s191 = sphi 0, %s177
      %s195 = sphi 0, %s195
      %s197 = sphi 0, %s195
      %s198 = sphi 0, %s197
      %s212 = sphi 0, %s198
      %s216 = sphi 0, %s216
      %s218 = sphi 0, %s216
      %s219 = sphi 0, %s218
      %s233 = sphi 0, %s219
      %s237 = sphi 0, %s237
      %s239 = sphi 0, %s237
      %s240 = sphi 0, %s239
      %s254 = sphi 0, %s240
      %s258 = sphi 0, %s258
      %s260 = sphi 0, %s258
      %s261 = sphi 0, %s260
      %s275 = sphi 0, %s261
      %s281 = sphi 0, %s283
      %s284 = sphi 0, %s281
      %s285 = sphi 0, %s284
      %s301 = sphi 0, %s285
      %s307 = sphi 0, %s309
      %s310 = sphi 0, %s307
      %s311 = sphi 0, %s310
      %s327 = sphi 0, %s311
    $region4: #{tpu_custom_call.1} parent=1 // loop_header_branch
      %28 = sbr.rel (%p26) target = $region8
    $region5: #{tpu_custom_call.1} parent=1 // loop_body
      %s30 = ssub.s32 %s25, 1
      %s31 = ssub.s32 %s25, 2
      %s32 = sadd.s32 %s25, 1
      %s33 = ssub.s32 %s25, %s32
      %p34 = scmp.eq.s32.totalorder %s33, 0
      %s36 = sadd.s32 %s35, 1
      %s37 = scalar_select %p34, %s35, %s36
      %p40 = pneg %p34
      %p41 = scmp.eq.s32.totalorder %s25, 1
      %p42 = por %p40, %p41
      %p43 = scmp.ne.s32.totalorder %s35, %s38
      %p44 = scmp.eq.s32.totalorder %s25, 0
      %p45 = por %p43, %p44
      %p46 = scmp.ne.s32.totalorder %s35, %s38
      %p47 = scmp.eq.s32.totalorder %s30, 1
      %p48 = por %p46, %p47
      %p49 = scmp.ne.s32.totalorder %s38, %s39
      %p50 = scmp.eq.s32.totalorder %s30, 0
      %p51 = por %p49, %p50
      %p52 = scmp.ne.s32.totalorder %s38, %s39
      %p53 = scmp.eq.s32.totalorder %s31, 1
      %p54 = por %p52, %p53
      %p56 = scmp.ne.s32.totalorder %s39, %s55
      %p57 = scmp.eq.s32.totalorder %s31, 0
      %p58 = por %p56, %p57
      %s59 = ssub.s32 %s25, %s32
      %p60 = scmp.eq.s32.totalorder %s59, 0
      %s62 = sadd.s32 %s61, 1
      %s63 = scalar_select %p60, %s61, %s62
      %p66 = pneg %p60
      %p67 = scmp.eq.s32.totalorder %s25, 1
      %p68 = por %p66, %p67
      %p69 = scmp.ne.s32.totalorder %s61, %s64
      %p70 = scmp.eq.s32.totalorder %s25, 0
      %p71 = por %p69, %p70
      %p72 = scmp.ne.s32.totalorder %s61, %s64
      %p73 = scmp.eq.s32.totalorder %s30, 1
      %p74 = por %p72, %p73
      %p75 = scmp.ne.s32.totalorder %s64, %s65
      %p76 = scmp.eq.s32.totalorder %s30, 0
      %p77 = por %p75, %p76
      %p78 = scmp.ne.s32.totalorder %s64, %s65
      %p79 = scmp.eq.s32.totalorder %s31, 1
      %p80 = por %p78, %p79
      %p82 = scmp.ne.s32.totalorder %s65, %s81
      %p83 = scmp.eq.s32.totalorder %s31, 0
      %p84 = por %p82, %p83
      %s85 = ssub.s32 %s25, %s32
      %p86 = scmp.eq.s32.totalorder %s85, 0
      %s88 = sadd.s32 %s87, 1
      %s89 = scalar_select %p86, %s87, %s88
      %p92 = pneg %p86
      %p93 = scmp.eq.s32.totalorder %s25, 1
      %p94 = por %p92, %p93
      %p95 = scmp.ne.s32.totalorder %s87, %s90
      %p96 = scmp.eq.s32.totalorder %s25, 0
      %p97 = por %p95, %p96
      %p98 = scmp.ne.s32.totalorder %s87, %s90
      %p99 = scmp.eq.s32.totalorder %s30, 1
      %p100 = por %p98, %p99
      %p101 = scmp.ne.s32.totalorder %s90, %s91
      %p102 = scmp.eq.s32.totalorder %s30, 0
      %p103 = por %p101, %p102
      %p104 = scmp.ne.s32.totalorder %s90, %s91
      %p105 = scmp.eq.s32.totalorder %s31, 1
      %p106 = por %p104, %p105
      %p108 = scmp.ne.s32.totalorder %s91, %s107
      %p109 = scmp.eq.s32.totalorder %s31, 0
      %p110 = por %p108, %p109
      %s112 = sadd.s32 %s111, 1
      %p115 = scmp.eq.s32.totalorder %s25, 1
      %p116 = scmp.ne.s32.totalorder %s111, %s113
      %p117 = scmp.eq.s32.totalorder %s25, 0
      %p118 = por %p116, %p117
      %p119 = scmp.ne.s32.totalorder %s111, %s113
      %p120 = scmp.eq.s32.totalorder %s30, 1
      %p121 = por %p119, %p120
      %p122 = scmp.ne.s32.totalorder %s113, %s114
      %p123 = scmp.eq.s32.totalorder %s30, 0
      %p124 = por %p122, %p123
      %p125 = scmp.ne.s32.totalorder %s113, %s114
      %p126 = scmp.eq.s32.totalorder %s31, 1
      %p127 = por %p125, %p126
      %p129 = scmp.ne.s32.totalorder %s114, %s128
      %p130 = scmp.eq.s32.totalorder %s31, 0
      %p131 = por %p129, %p130
      %s133 = sadd.s32 %s132, 1
      %p136 = scmp.eq.s32.totalorder %s25, 1
      %p137 = scmp.ne.s32.totalorder %s132, %s134
      %p138 = scmp.eq.s32.totalorder %s25, 0
      %p139 = por %p137, %p138
      %p140 = scmp.ne.s32.totalorder %s132, %s134
      %p141 = scmp.eq.s32.totalorder %s30, 1
      %p142 = por %p140, %p141
      %p143 = scmp.ne.s32.totalorder %s134, %s135
      %p144 = scmp.eq.s32.totalorder %s30, 0
      %p145 = por %p143, %p144
      %p146 = scmp.ne.s32.totalorder %s134, %s135
      %p147 = scmp.eq.s32.totalorder %s31, 1
      %p148 = por %p146, %p147
      %p150 = scmp.ne.s32.totalorder %s135, %s149
      %p151 = scmp.eq.s32.totalorder %s31, 0
      %p152 = por %p150, %p151
      %s154 = sadd.s32 %s153, 1
      %p157 = scmp.eq.s32.totalorder %s25, 1
      %p158 = scmp.ne.s32.totalorder %s153, %s155
      %p159 = scmp.eq.s32.totalorder %s25, 0
      %p160 = por %p158, %p159
      %p161 = scmp.ne.s32.totalorder %s153, %s155
      %p162 = scmp.eq.s32.totalorder %s30, 1
      %p163 = por %p161, %p162
      %p164 = scmp.ne.s32.totalorder %s155, %s156
      %p165 = scmp.eq.s32.totalorder %s30, 0
      %p166 = por %p164, %p165
      %p167 = scmp.ne.s32.totalorder %s155, %s156
      %p168 = scmp.eq.s32.totalorder %s31, 1
      %p169 = por %p167, %p168
      %p171 = scmp.ne.s32.totalorder %s156, %s170
      %p172 = scmp.eq.s32.totalorder %s31, 0
      %p173 = por %p171, %p172
      %s175 = sadd.s32 %s174, 1
      %p178 = scmp.eq.s32.totalorder %s25, 1
      %p179 = scmp.ne.s32.totalorder %s174, %s176
      %p180 = scmp.eq.s32.totalorder %s25, 0
      %p181 = por %p179, %p180
      %p182 = scmp.ne.s32.totalorder %s174, %s176
      %p183 = scmp.eq.s32.totalorder %s30, 1
      %p184 = por %p182, %p183
      %p185 = scmp.ne.s32.totalorder %s176, %s177
      %p186 = scmp.eq.s32.totalorder %s30, 0
      %p187 = por %p185, %p186
      %p188 = scmp.ne.s32.totalorder %s176, %s177
      %p189 = scmp.eq.s32.totalorder %s31, 1
      %p190 = por %p188, %p189
      %p192 = scmp.ne.s32.totalorder %s177, %s191
      %p193 = scmp.eq.s32.totalorder %s31, 0
      %p194 = por %p192, %p193
      %s196 = sadd.s32 %s195, 1
      %p199 = scmp.eq.s32.totalorder %s25, 1
      %p200 = scmp.ne.s32.totalorder %s195, %s197
      %p201 = scmp.eq.s32.totalorder %s25, 0
      %p202 = por %p200, %p201
      %p203 = scmp.ne.s32.totalorder %s195, %s197
      %p204 = scmp.eq.s32.totalorder %s30, 1
      %p205 = por %p203, %p204
      %p206 = scmp.ne.s32.totalorder %s197, %s198
      %p207 = scmp.eq.s32.totalorder %s30, 0
      %p208 = por %p206, %p207
      %p209 = scmp.ne.s32.totalorder %s197, %s198
      %p210 = scmp.eq.s32.totalorder %s31, 1
      %p211 = por %p209, %p210
      %p213 = scmp.ne.s32.totalorder %s198, %s212
      %p214 = scmp.eq.s32.totalorder %s31, 0
      %p215 = por %p213, %p214
      %s217 = sadd.s32 %s216, 1
      %p220 = scmp.eq.s32.totalorder %s25, 1
      %p221 = scmp.ne.s32.totalorder %s216, %s218
      %p222 = scmp.eq.s32.totalorder %s25, 0
      %p223 = por %p221, %p222
      %p224 = scmp.ne.s32.totalorder %s216, %s218
      %p225 = scmp.eq.s32.totalorder %s30, 1
      %p226 = por %p224, %p225
      %p227 = scmp.ne.s32.totalorder %s218, %s219
      %p228 = scmp.eq.s32.totalorder %s30, 0
      %p229 = por %p227, %p228
      %p230 = scmp.ne.s32.totalorder %s218, %s219
      %p231 = scmp.eq.s32.totalorder %s31, 1
      %p232 = por %p230, %p231
      %p234 = scmp.ne.s32.totalorder %s219, %s233
      %p235 = scmp.eq.s32.totalorder %s31, 0
      %p236 = por %p234, %p235
      %s238 = sadd.s32 %s237, 1
      %p241 = scmp.eq.s32.totalorder %s25, 1
      %p242 = scmp.ne.s32.totalorder %s237, %s239
      %p243 = scmp.eq.s32.totalorder %s25, 0
      %p244 = por %p242, %p243
      %p245 = scmp.ne.s32.totalorder %s237, %s239
      %p246 = scmp.eq.s32.totalorder %s30, 1
      %p247 = por %p245, %p246
      %p248 = scmp.ne.s32.totalorder %s239, %s240
      %p249 = scmp.eq.s32.totalorder %s30, 0
      %p250 = por %p248, %p249
      %p251 = scmp.ne.s32.totalorder %s239, %s240
      %p252 = scmp.eq.s32.totalorder %s31, 1
      %p253 = por %p251, %p252
      %p255 = scmp.ne.s32.totalorder %s240, %s254
      %p256 = scmp.eq.s32.totalorder %s31, 0
      %p257 = por %p255, %p256
      %s259 = sadd.s32 %s258, 1
      %p262 = scmp.eq.s32.totalorder %s25, 1
      %p263 = scmp.ne.s32.totalorder %s258, %s260
      %p264 = scmp.eq.s32.totalorder %s25, 0
      %p265 = por %p263, %p264
      %p266 = scmp.ne.s32.totalorder %s258, %s260
      %p267 = scmp.eq.s32.totalorder %s30, 1
      %p268 = por %p266, %p267
      %p269 = scmp.ne.s32.totalorder %s260, %s261
      %p270 = scmp.eq.s32.totalorder %s30, 0
      %p271 = por %p269, %p270
      %p272 = scmp.ne.s32.totalorder %s260, %s261
      %p273 = scmp.eq.s32.totalorder %s31, 1
      %p274 = por %p272, %p273
      %p276 = scmp.ne.s32.totalorder %s261, %s275
      %p277 = scmp.eq.s32.totalorder %s31, 0
      %p278 = por %p276, %p277
      %s279 = ssub.s32 %s25, %s32
      %p280 = scmp.eq.s32.totalorder %s279, 0
      %s282 = sadd.s32 %s281, 1
      %s283 = scalar_select %p280, %s281, %s282
      %p286 = pneg %p280
      %p287 = scmp.eq.s32.totalorder %s25, 1
      %p288 = por %p286, %p287
      %p289 = scmp.ne.s32.totalorder %s281, %s284
      %p290 = scmp.eq.s32.totalorder %s25, 0
      %p291 = por %p289, %p290
      %p292 = scmp.ne.s32.totalorder %s281, %s284
      %p293 = scmp.eq.s32.totalorder %s30, 1
      %p294 = por %p292, %p293
      %p295 = scmp.ne.s32.totalorder %s284, %s285
      %p296 = scmp.eq.s32.totalorder %s30, 0
      %p297 = por %p295, %p296
      %p298 = scmp.ne.s32.totalorder %s284, %s285
      %p299 = scmp.eq.s32.totalorder %s31, 1
      %p300 = por %p298, %p299
      %p302 = scmp.ne.s32.totalorder %s285, %s301
      %p303 = scmp.eq.s32.totalorder %s31, 0
      %p304 = por %p302, %p303
      %s305 = ssub.s32 %s25, %s32
      %p306 = scmp.eq.s32.totalorder %s305, 0
      %s308 = sadd.s32 %s307, 1
      %s309 = scalar_select %p306, %s307, %s308
      %p312 = pneg %p306
      %p313 = scmp.eq.s32.totalorder %s25, 1
      %p314 = por %p312, %p313
      %p315 = scmp.ne.s32.totalorder %s307, %s310
      %p316 = scmp.eq.s32.totalorder %s25, 0
      %p317 = por %p315, %p316
      %p318 = scmp.ne.s32.totalorder %s307, %s310
      %p319 = scmp.eq.s32.totalorder %s30, 1
      %p320 = por %p318, %p319
      %p321 = scmp.ne.s32.totalorder %s310, %s311
      %p322 = scmp.eq.s32.totalorder %s30, 0
      %p323 = por %p321, %p322
      %p324 = scmp.ne.s32.totalorder %s310, %s311
      %p325 = scmp.eq.s32.totalorder %s31, 1
      %p326 = por %p324, %p325
      %p328 = scmp.ne.s32.totalorder %s311, %s327
      %p329 = scmp.eq.s32.totalorder %s31, 0
      %p330 = por %p328, %p329
      %p331 = scmp.le.s32.totalorder 1, %s25
      %p332 = scmp.lt.s32.totalorder %s25, 3
      %p333 = pnand %p331, %p332
      %p334 = pneg %p333
      // Predicated region
      $region9: #{tpu_custom_call.1} parent=5 // pred_check
        _
      $region10: #{tpu_custom_call.1} parent=5 // pred_check_branch
        %336 = sbr.rel (%p333) target = $region12
      $region11: #{tpu_custom_call.1} parent=5 // pred_region
        %s337 = ssub.s32 %s25, 1
        // Predicated region
        $region13: #{tpu_custom_call.1} parent=11 // pred_check
          %p338 = pneg %p124
        $region14: #{tpu_custom_call.1} parent=11 // pred_check_branch
          %340 = sbr.rel (%p338) target = $region16
        $region15: #{tpu_custom_call.1} parent=11 // pred_region
          _
        $region16: #{tpu_custom_call.1} parent=11 // pred_fallthru
          _
        // Predicated region
        $region17: #{tpu_custom_call.1} parent=11 // pred_check
          %p341 = pneg %p145
        $region18: #{tpu_custom_call.1} parent=11 // pred_check_branch
          %343 = sbr.rel (%p341) target = $region20
        $region19: #{tpu_custom_call.1} parent=11 // pred_region
          _
        $region20: #{tpu_custom_call.1} parent=11 // pred_fallthru
          _
        // Predicated region
        $region21: #{tpu_custom_call.1} parent=11 // pred_check
          %p344 = pneg %p166
        $region22: #{tpu_custom_call.1} parent=11 // pred_check_branch
          %346 = sbr.rel (%p344) target = $region24
        $region23: #{tpu_custom_call.1} parent=11 // pred_region
          _
        $region24: #{tpu_custom_call.1} parent=11 // pred_fallthru
          _
        // Predicated region
        $region25: #{tpu_custom_call.1} parent=11 // pred_check
          %p347 = pneg %p187
        $region26: #{tpu_custom_call.1} parent=11 // pred_check_branch
          %349 = sbr.rel (%p347) target = $region28
        $region27: #{tpu_custom_call.1} parent=11 // pred_region
          _
        $region28: #{tpu_custom_call.1} parent=11 // pred_fallthru
          _
        // Predicated region
        $region29: #{tpu_custom_call.1} parent=11 // pred_check
          %p350 = pneg %p208
        $region30: #{tpu_custom_call.1} parent=11 // pred_check_branch
          %352 = sbr.rel (%p350) target = $region32
        $region31: #{tpu_custom_call.1} parent=11 // pred_region
          _
        $region32: #{tpu_custom_call.1} parent=11 // pred_fallthru
          _
        // Predicated region
        $region33: #{tpu_custom_call.1} parent=11 // pred_check
          %p353 = pneg %p229
        $region34: #{tpu_custom_call.1} parent=11 // pred_check_branch
          %355 = sbr.rel (%p353) target = $region36
        $region35: #{tpu_custom_call.1} parent=11 // pred_region
          _
        $region36: #{tpu_custom_call.1} parent=11 // pred_fallthru
          _
        // Predicated region
        $region37: #{tpu_custom_call.1} parent=11 // pred_check
          %p356 = pneg %p250
        $region38: #{tpu_custom_call.1} parent=11 // pred_check_branch
          %358 = sbr.rel (%p356) target = $region40
        $region39: #{tpu_custom_call.1} parent=11 // pred_region
          _
        $region40: #{tpu_custom_call.1} parent=11 // pred_fallthru
          _
        // Predicated region
        $region41: #{tpu_custom_call.1} parent=11 // pred_check
          %p359 = pneg %p271
        $region42: #{tpu_custom_call.1} parent=11 // pred_check_branch
          %361 = sbr.rel (%p359) target = $region44
        $region43: #{tpu_custom_call.1} parent=11 // pred_region
          _
        $region44: #{tpu_custom_call.1} parent=11 // pred_fallthru
          _
      $region12: #{tpu_custom_call.1} parent=5 // pred_fallthru
        _
      %p362 = scmp.lt.s32.totalorder %s25, 2
      // Predicated region
      $region45: #{tpu_custom_call.1} parent=5 // pred_check
        %p363 = pneg %p362
      $region46: #{tpu_custom_call.1} parent=5 // pred_check_branch
        %365 = sbr.rel (%p363) target = $region48
      $region47: #{tpu_custom_call.1} parent=5 // pred_region
        // Predicated region
        $region49: #{tpu_custom_call.1} parent=47 // pred_check
          %p366 = pneg %p45
        $region50: #{tpu_custom_call.1} parent=47 // pred_check_branch
          %368 = sbr.rel (%p366) target = $region52
        $region51: #{tpu_custom_call.1} parent=47 // pred_region
          %p369 = scmp.lt.s32.totalorder %s25, 1
          %s370 = scalar_select %p369, %s25, 1
          %s371 = smul.addr %s370, 2
          %s372 = smul.addr %s371, 4
          %s373 = scalar_lea.vmem %s0, %s372
        $region52: #{tpu_custom_call.1} parent=47 // pred_fallthru
          _
        // Predicated region
        $region53: #{tpu_custom_call.1} parent=47 // pred_check
          %p374 = pneg %p71
        $region54: #{tpu_custom_call.1} parent=47 // pred_check_branch
          %376 = sbr.rel (%p374) target = $region56
        $region55: #{tpu_custom_call.1} parent=47 // pred_region
          %p377 = scmp.lt.s32.totalorder %s25, 1
          %s378 = scalar_select %p377, %s25, 1
          %s379 = smul.addr %s378, 32
          %s380 = smul.addr %s379, 8
          %s381 = scalar_lea.vmem %s1, %s380
        $region56: #{tpu_custom_call.1} parent=47 // pred_fallthru
          _
        // Predicated region
        $region57: #{tpu_custom_call.1} parent=47 // pred_check
          %p382 = pneg %p97
        $region58: #{tpu_custom_call.1} parent=47 // pred_check_branch
          %384 = sbr.rel (%p382) target = $region60
        $region59: #{tpu_custom_call.1} parent=47 // pred_region
          %p385 = scmp.lt.s32.totalorder %s25, 1
          %s386 = scalar_select %p385, %s25, 1
          %s387 = smul.addr %s386, 2
          %s388 = smul.addr %s387, 4
          %s389 = scalar_lea.vmem %s2, %s388
        $region60: #{tpu_custom_call.1} parent=47 // pred_fallthru
          _
      $region48: #{tpu_custom_call.1} parent=5 // pred_fallthru
        _
      %p390 = scmp.le.s32.totalorder 1, %s25
      %p391 = scmp.lt.s32.totalorder %s25, 3
      %p392 = pnand %p390, %p391
      %p393 = pneg %p392
      // Predicated region
      $region61: #{tpu_custom_call.1} parent=5 // pred_check
        _
      $region62: #{tpu_custom_call.1} parent=5 // pred_check_branch
        %395 = sbr.rel (%p392) target = $region64
      $region63: #{tpu_custom_call.1} parent=5 // pred_region
        %s396 = ssub.s32 %s25, 1
        %p397 = scmp.lt.s32.totalorder %s30, 1
        %s398 = scalar_select %p397, %s30, 1
        %s399 = smul.addr %s398, 2
        %s400 = smul.addr %s399, 4
        %s401 = scalar_lea.vmem %s0, %s400
        %p402 = pneg %p51
        %p403 = pneg %p48
        %p404 = scmp.lt.s32.totalorder %s30, 1
        %s405 = scalar_select %p404, %s30, 1
        %s406 = smul.addr %s405, 32
        %s407 = smul.addr %s406, 8
        %s408 = scalar_lea.vmem %s1, %s407
        %p409 = pneg %p77
        %p410 = pneg %p74
        %p411 = scmp.lt.s32.totalorder %s30, 1
        %s412 = scalar_select %p411, %s30, 1
        %s413 = smul.addr %s412, 2
        %s414 = smul.addr %s413, 4
        %s415 = scalar_lea.vmem %s2, %s414
        %p416 = pneg %p103
        %p417 = pneg %p100
        %p418 = pneg %p124
        %p419 = pneg %p121
        %p420 = pneg %p145
        %p421 = pneg %p142
        %p422 = pneg %p166
        %p423 = pneg %p163
        %p424 = pneg %p187
        %p425 = pneg %p184
        %p426 = pneg %p208
        %p427 = pneg %p205
        %p428 = pneg %p229
        %p429 = pneg %p226
        %p430 = pneg %p250
        %p431 = pneg %p247
        %p432 = pneg %p271
        %p433 = pneg %p268
        %p434 = pneg %p297
        %p435 = pneg %p294
        %s436 = sand.u32 %s284, 1
        %s437 = scalar_lea.sflag [#allocation3], %s436
        %s438 = sand.u32 %s284, 1
        %s439 = smul.addr %s438, 8
        %s440 = scalar_lea.vmem [#allocation2], %s439
        %p441 = pneg %p323
        %p442 = pneg %p320
        %s443 = sand.u32 %s310, 1
        %s444 = scalar_lea.sflag [#allocation5], %s443
        %s445 = sand.u32 %s310, 1
        %s446 = smul.addr %s445, 4
        %s447 = scalar_lea.vmem [#allocation4], %s446
        %p448 = scmp.lt.s32.totalorder %s30, 1
        %s449 = scalar_select %p448, %s30, 1
        %s450 = smul.addr %s449, 2
        %s451 = smul.addr %s450, 4
        %s452 = scalar_lea.vmem %s0, %s451
        %p453 = scmp.lt.s32.totalorder %s30, 1
        %s454 = scalar_select %p453, %s30, 1
        %s455 = smul.addr %s454, 32
        %s456 = smul.addr %s455, 8
        %s457 = scalar_lea.vmem %s1, %s456
        %p458 = scmp.lt.s32.totalorder %s30, 1
        %s459 = scalar_select %p458, %s30, 1
        %s460 = smul.addr %s459, 2
        %s461 = smul.addr %s460, 4
        %s462 = scalar_lea.vmem %s2, %s461
        %v463 = vld [vmem:[%s452] sm:$0xff]
        %v464 = vld [vmem:[%s3] sm:$0x3]
        %v465 = vld [vmem:[%s4] sm:$0x3]
        %467 = vset.pattern.permute.xlu0 0
        %468 = vperm.xlu0 %467, %v465
        %v469 = vpop.permute.xlu0 %468
        %v472 = vcombine.high %v463, %v463
        %vm473 = vcmask 31744
        %v475 = vsel %vm473, %v464, 0
        %vm477 = vcmask 1043456
        %v478 = vsel %vm477, %v463, 0
        %v480 = vsel %vm477, %v472, 0
        %482 = vmatprep.subr.mxu0 %v480
        %483 = vmatpush1.msra.mxu0 %v478
        %484 = vmatprep.subr.mxu0 0.0
        %485 = vmatpush1.msra.mxu0 0.0
        %486 = vmatprep.subr.mxu0 0.0
        %487 = vmatpush1.msra.mxu0 0.0
        %488 = vmatprep.subr.mxu0 0.0
        %489 = vmatpush1.msra.mxu0 0.0
        %490 = vmatprep.subr.mxu0 0.0
        %491 = vmatpush1.msra.mxu0 0.0
        %492 = vmatprep.subr.mxu0 0.0
        %493 = vmatpush1.msra.mxu0 0.0
        %494 = vmatprep.subr.mxu0 0.0
        %495 = vmatpush1.msra.mxu0 0.0
        %496 = vmatprep.subr.mxu0 0.0
        %497 = vmatpush1.msra.mxu0 0.0
        %498 = vmatprep.subr.mxu0 0.0
        %499 = vmatpush1.msra.mxu0 0.0
        %500 = vmatprep.subr.mxu0 0.0
        %501 = vmatpush1.msra.mxu0 0.0
        %502 = vmatprep.subr.mxu0 0.0
        %503 = vmatpush1.msra.mxu0 0.0
        %504 = vmatprep.subr.mxu0 0.0
        %505 = vmatpush1.msra.mxu0 0.0
        %506 = vmatprep.subr.mxu0 0.0
        %507 = vmatpush1.msra.mxu0 0.0
        %508 = vmatprep.subr.mxu0 0.0
        %509 = vmatpush1.msra.mxu0 0.0
        %510 = vmatprep.subr.mxu0 0.0
        %511 = vmatpush1.msra.mxu0 0.0
        %512 = vmatprep.subr.mxu0 0.0
        %513 = vmatpush1.msra.mxu0 0.0
        %514 = vmatprep.subr.mxu0 0.0
        %515 = vmatpush1.msra.mxu0 0.0
        %516 = vmatprep.subr.mxu0 0.0
        %517 = vmatpush1.msra.mxu0 0.0
        %518 = vmatprep.subr.mxu0 0.0
        %519 = vmatpush1.msra.mxu0 0.0
        %520 = vmatprep.subr.mxu0 0.0
        %521 = vmatpush1.msra.mxu0 0.0
        %522 = vmatprep.subr.mxu0 0.0
        %523 = vmatpush1.msra.mxu0 0.0
        %524 = vmatprep.subr.mxu0 0.0
        %525 = vmatpush1.msra.mxu0 0.0
        %526 = vmatprep.subr.mxu0 0.0
        %527 = vmatpush1.msra.mxu0 0.0
        %528 = vmatprep.subr.mxu0 0.0
        %529 = vmatpush1.msra.mxu0 0.0
        %530 = vmatprep.subr.mxu0 0.0
        %531 = vmatpush1.msra.mxu0 0.0
        %532 = vmatprep.subr.mxu0 0.0
        %533 = vmatpush1.msra.mxu0 0.0
        %534 = vmatprep.subr.mxu0 0.0
        %535 = vmatpush1.msra.mxu0 0.0
        %536 = vmatprep.subr.mxu0 0.0
        %537 = vmatpush1.msra.mxu0 0.0
        %538 = vmatprep.subr.mxu0 0.0
        %539 = vmatpush1.msra.mxu0 0.0
        %540 = vmatprep.subr.mxu0 0.0
        %541 = vmatpush1.msra.mxu0 0.0
        %542 = vmatprep.subr.mxu0 0.0
        %543 = vmatpush1.msra.mxu0 0.0
        %544 = vmatprep.subr.mxu0 0.0
        %545 = vmatpush1.msra.mxu0 0.0
        %546 = vmatprep.mubr.f32.mxu0 0.0
        %547 = vmatmul.mubr.f32.gmra.mrb[0].mxu0 %v475
        %v548 = vpop.f32.mrb[0].mxu0
        %v549 = vadd.f32 %v469, %v548
        %v550 = vpop.f32.mrb[0].mxu0
        %v551 = vadd.f32 %v469, %v550
        %552 = vdwg.mxu0
        %v553 = vld [vmem:[%s457] sm:$0xff]
        %v554 = vld [vmem:[%s457 + $0x8] sm:$0xff]
        %v555 = vld [vmem:[%s457 + $0x10] sm:$0xff]
        %v556 = vld [vmem:[%s457 + $0x18] sm:$0xff]
        %v557 = vld [vmem:[%s457 + $0x20] sm:$0xff]
        %v558 = vld [vmem:[%s457 + $0x28] sm:$0xff]
        %v559 = vld [vmem:[%s457 + $0x30] sm:$0xff]
        %v560 = vld [vmem:[%s457 + $0x38] sm:$0xff]
        %v561 = vld [vmem:[%s457 + $0x40] sm:$0xff]
        %v562 = vld [vmem:[%s457 + $0x48] sm:$0xff]
        %v563 = vld [vmem:[%s457 + $0x50] sm:$0xff]
        %v564 = vld [vmem:[%s457 + $0x58] sm:$0xff]
        %v565 = vld [vmem:[%s457 + $0x60] sm:$0xff]
        %v566 = vld [vmem:[%s457 + $0x68] sm:$0xff]
        %v567 = vld [vmem:[%s457 + $0x70] sm:$0xff]
        %v568 = vld [vmem:[%s457 + $0x78] sm:$0xff]
        %v569 = vld [vmem:[%s457 + $0x80] sm:$0xff]
        %v570 = vld [vmem:[%s457 + $0x88] sm:$0xff]
        %v571 = vld [vmem:[%s457 + $0x90] sm:$0xff]
        %v572 = vld [vmem:[%s457 + $0x98] sm:$0xff]
        %v573 = vld [vmem:[%s457 + $0xa0] sm:$0xff]
        %v574 = vld [vmem:[%s457 + $0xa8] sm:$0xff]
        %v575 = vld [vmem:[%s457 + $0xb0] sm:$0xff]
        %v576 = vld [vmem:[%s457 + $0xb8] sm:$0xff]
        %v577 = vld [vmem:[%s457 + $0xc0] sm:$0xff]
        %v578 = vld [vmem:[%s457 + $0xc8] sm:$0xff]
        %v579 = vld [vmem:[%s457 + $0xd0] sm:$0xff]
        %v580 = vld [vmem:[%s457 + $0xd8] sm:$0xff]
        %v581 = vld [vmem:[%s457 + $0xe0] sm:$0xff]
        %v582 = vld [vmem:[%s457 + $0xe8] sm:$0xff]
        %v583 = vld [vmem:[%s457 + $0xf0] sm:$0xff]
        %v584 = vld [vmem:[%s457 + $0xf8] sm:$0xff]
        %v585 = vld [vmem:[%s5] sm:$0xf]
        %v587 = vsel %vm473, %v553, 0
        %v590 = vsel %vm473, %v554, 0
        %v593 = vsel %vm473, %v555, 0
        %v596 = vsel %vm473, %v556, 0
        %v599 = vsel %vm473, %v557, 0
        %v602 = vsel %vm473, %v558, 0
        %v605 = vsel %vm473, %v559, 0
        %v608 = vsel %vm473, %v560, 0
        %v611 = vsel %vm473, %v561, 0
        %v614 = vsel %vm473, %v562, 0
        %v617 = vsel %vm473, %v563, 0
        %v620 = vsel %vm473, %v564, 0
        %v623 = vsel %vm473, %v565, 0
        %v626 = vsel %vm473, %v566, 0
        %v629 = vsel %vm473, %v567, 0
        %v632 = vsel %vm473, %v568, 0
        %v635 = vsel %vm473, %v569, 0
        %v638 = vsel %vm473, %v570, 0
        %v641 = vsel %vm473, %v571, 0
        %v644 = vsel %vm473, %v572, 0
        %v647 = vsel %vm473, %v573, 0
        %v650 = vsel %vm473, %v574, 0
        %v653 = vsel %vm473, %v575, 0
        %v656 = vsel %vm473, %v576, 0
        %v659 = vsel %vm473, %v577, 0
        %v662 = vsel %vm473, %v578, 0
        %v665 = vsel %vm473, %v579, 0
        %v668 = vsel %vm473, %v580, 0
        %v671 = vsel %vm473, %v581, 0
        %v674 = vsel %vm473, %v582, 0
        %v677 = vsel %vm473, %v583, 0
        %v680 = vsel %vm473, %v584, 0
        %v683 = vsel %vm477, %v585, 0
        %685 = vmatprep.subr.mxu0 0.0
        %686 = vmatpush1.msra.mxu0 %v683
        %687 = vmatprep.subr.mxu0 0.0
        %688 = vmatpush1.msra.mxu0 0.0
        %689 = vmatprep.subr.mxu0 0.0
        %690 = vmatpush1.msra.mxu0 0.0
        %691 = vmatprep.subr.mxu0 0.0
        %692 = vmatpush1.msra.mxu0 0.0
        %693 = vmatprep.subr.mxu0 0.0
        %694 = vmatpush1.msra.mxu0 0.0
        %695 = vmatprep.subr.mxu0 0.0
        %696 = vmatpush1.msra.mxu0 0.0
        %697 = vmatprep.subr.mxu0 0.0
        %698 = vmatpush1.msra.mxu0 0.0
        %699 = vmatprep.subr.mxu0 0.0
        %700 = vmatpush1.msra.mxu0 0.0
        %701 = vmatprep.subr.mxu0 0.0
        %702 = vmatpush1.msra.mxu0 0.0
        %703 = vmatprep.subr.mxu0 0.0
        %704 = vmatpush1.msra.mxu0 0.0
        %705 = vmatprep.subr.mxu0 0.0
        %706 = vmatpush1.msra.mxu0 0.0
        %707 = vmatprep.subr.mxu0 0.0
        %708 = vmatpush1.msra.mxu0 0.0
        %709 = vmatprep.subr.mxu0 0.0
        %710 = vmatpush1.msra.mxu0 0.0
        %711 = vmatprep.subr.mxu0 0.0
        %712 = vmatpush1.msra.mxu0 0.0
        %713 = vmatprep.subr.mxu0 0.0
        %714 = vmatpush1.msra.mxu0 0.0
        %715 = vmatprep.subr.mxu0 0.0
        %716 = vmatpush1.msra.mxu0 0.0
        %717 = vmatprep.subr.mxu0 0.0
        %718 = vmatpush1.msra.mxu0 0.0
        %719 = vmatprep.subr.mxu0 0.0
        %720 = vmatpush1.msra.mxu0 0.0
        %721 = vmatprep.subr.mxu0 0.0
        %722 = vmatpush1.msra.mxu0 0.0
        %723 = vmatprep.subr.mxu0 0.0
        %724 = vmatpush1.msra.mxu0 0.0
        %725 = vmatprep.subr.mxu0 0.0
        %726 = vmatpush1.msra.mxu0 0.0
        %727 = vmatprep.subr.mxu0 0.0
        %728 = vmatpush1.msra.mxu0 0.0
        %729 = vmatprep.subr.mxu0 0.0
        %730 = vmatpush1.msra.mxu0 0.0
        %731 = vmatprep.subr.mxu0 0.0
        %732 = vmatpush1.msra.mxu0 0.0
        %733 = vmatprep.subr.mxu0 0.0
        %734 = vmatpush1.msra.mxu0 0.0
        %735 = vmatprep.subr.mxu0 0.0
        %736 = vmatpush1.msra.mxu0 0.0
        %737 = vmatprep.subr.mxu0 0.0
        %738 = vmatpush1.msra.mxu0 0.0
        %739 = vmatprep.subr.mxu0 0.0
        %740 = vmatpush1.msra.mxu0 0.0
        %741 = vmatprep.subr.mxu0 0.0
        %742 = vmatpush1.msra.mxu0 0.0
        %743 = vmatprep.subr.mxu0 0.0
        %744 = vmatpush1.msra.mxu0 0.0
        %745 = vmatprep.subr.mxu0 0.0
        %746 = vmatpush1.msra.mxu0 0.0
        %747 = vmatprep.subr.mxu0 0.0
        %748 = vmatpush1.msra.mxu0 0.0
        %749 = vmatprep.mubr.f32.mxu0 0.0
        %750 = vmatmul.mubr.f32.gmra.mrb[0].mxu0 %v587
        %v751 = vpop.f32.mrb[0].mxu0
        %v752 = vadd.f32 0.0, %v751
        %v753 = vpop.f32.mrb[0].mxu0
        %754 = vmatprep.mubr.f32.mxu0 0.0
        %755 = vmatmul.mubr.f32.gmra.mrb[0].mxu0 %v590
        %v756 = vpop.f32.mrb[0].mxu0
        %v757 = vadd.f32 0.0, %v756
        %v758 = vpop.f32.mrb[0].mxu0
        %759 = vmatprep.mubr.f32.mxu0 0.0
        %760 = vmatmul.mubr.f32.gmra.mrb[0].mxu0 %v593
        %v761 = vpop.f32.mrb[0].mxu0
        %v762 = vadd.f32 0.0, %v761
        %v763 = vpop.f32.mrb[0].mxu0
        %764 = vmatprep.mubr.f32.mxu0 0.0
        %765 = vmatmul.mubr.f32.gmra.mrb[0].mxu0 %v596
        %v766 = vpop.f32.mrb[0].mxu0
        %v767 = vadd.f32 0.0, %v766
        %v768 = vpop.f32.mrb[0].mxu0
        %769 = vmatprep.mubr.f32.mxu0 0.0
        %770 = vmatmul.mubr.f32.gmra.mrb[0].mxu0 %v599
        %v771 = vpop.f32.mrb[0].mxu0
        %v772 = vadd.f32 0.0, %v771
        %v773 = vpop.f32.mrb[0].mxu0
        %774 = vmatprep.mubr.f32.mxu0 0.0
        %775 = vmatmul.mubr.f32.gmra.mrb[0].mxu0 %v602
        %v776 = vpop.f32.mrb[0].mxu0
        %v777 = vadd.f32 0.0, %v776
        %v778 = vpop.f32.mrb[0].mxu0
        %779 = vmatprep.mubr.f32.mxu0 0.0
        %780 = vmatmul.mubr.f32.gmra.mrb[0].mxu0 %v605
        %v781 = vpop.f32.mrb[0].mxu0
        %v782 = vadd.f32 0.0, %v781
        %v783 = vpop.f32.mrb[0].mxu0
        %784 = vmatprep.mubr.f32.mxu0 0.0
        %785 = vmatmul.mubr.f32.gmra.mrb[0].mxu0 %v608
        %v786 = vpop.f32.mrb[0].mxu0
        %v787 = vadd.f32 0.0, %v786
        %v788 = vpop.f32.mrb[0].mxu0
        %789 = vmatprep.mubr.f32.mxu0 0.0
        %790 = vmatmul.mubr.f32.gmra.mrb[0].mxu0 %v611
        %v791 = vpop.f32.mrb[0].mxu0
        %v792 = vadd.f32 0.0, %v791
        %v793 = vpop.f32.mrb[0].mxu0
        %794 = vmatprep.mubr.f32.mxu0 0.0
        %795 = vmatmul.mubr.f32.gmra.mrb[0].mxu0 %v614
        %v796 = vpop.f32.mrb[0].mxu0
        %v797 = vadd.f32 0.0, %v796
        %v798 = vpop.f32.mrb[0].mxu0
        %799 = vmatprep.mubr.f32.mxu0 0.0
        %800 = vmatmul.mubr.f32.gmra.mrb[0].mxu0 %v617
        %v801 = vpop.f32.mrb[0].mxu0
        %v802 = vadd.f32 0.0, %v801
        %v803 = vpop.f32.mrb[0].mxu0
        %804 = vmatprep.mubr.f32.mxu0 0.0
        %805 = vmatmul.mubr.f32.gmra.mrb[0].mxu0 %v620
        %v806 = vpop.f32.mrb[0].mxu0
        %v807 = vadd.f32 0.0, %v806
        %v808 = vpop.f32.mrb[0].mxu0
        %809 = vmatprep.mubr.f32.mxu0 0.0
        %810 = vmatmul.mubr.f32.gmra.mrb[0].mxu0 %v623
        %v811 = vpop.f32.mrb[0].mxu0
        %v812 = vadd.f32 0.0, %v811
        %v813 = vpop.f32.mrb[0].mxu0
        %814 = vmatprep.mubr.f32.mxu0 0.0
        %815 = vmatmul.mubr.f32.gmra.mrb[0].mxu0 %v626
        %v816 = vpop.f32.mrb[0].mxu0
        %v817 = vadd.f32 0.0, %v816
        %v818 = vpop.f32.mrb[0].mxu0
        %819 = vmatprep.mubr.f32.mxu0 0.0
        %820 = vmatmul.mubr.f32.gmra.mrb[0].mxu0 %v629
        %v821 = vpop.f32.mrb[0].mxu0
        %v822 = vadd.f32 0.0, %v821
        %v823 = vpop.f32.mrb[0].mxu0
        %824 = vmatprep.mubr.f32.mxu0 0.0
        %825 = vmatmul.mubr.f32.gmra.mrb[0].mxu0 %v632
        %v826 = vpop.f32.mrb[0].mxu0
        %v827 = vadd.f32 0.0, %v826
        %v828 = vpop.f32.mrb[0].mxu0
        %829 = vmatprep.mubr.f32.mxu0 0.0
        %830 = vmatmul.mubr.f32.gmra.mrb[0].mxu0 %v635
        %v831 = vpop.f32.mrb[0].mxu0
        %v832 = vadd.f32 0.0, %v831
        %v833 = vpop.f32.mrb[0].mxu0
        %834 = vmatprep.mubr.f32.mxu0 0.0
        %835 = vmatmul.mubr.f32.gmra.mrb[0].mxu0 %v638
        %v836 = vpop.f32.mrb[0].mxu0
        %v837 = vadd.f32 0.0, %v836
        %v838 = vpop.f32.mrb[0].mxu0
        %839 = vmatprep.mubr.f32.mxu0 0.0
        %840 = vmatmul.mubr.f32.gmra.mrb[0].mxu0 %v641
        %v841 = vpop.f32.mrb[0].mxu0
        %v842 = vadd.f32 0.0, %v841
        %v843 = vpop.f32.mrb[0].mxu0
        %844 = vmatprep.mubr.f32.mxu0 0.0
        %845 = vmatmul.mubr.f32.gmra.mrb[0].mxu0 %v644
        %v846 = vpop.f32.mrb[0].mxu0
        %v847 = vadd.f32 0.0, %v846
        %v848 = vpop.f32.mrb[0].mxu0
        %849 = vmatprep.mubr.f32.mxu0 0.0
        %850 = vmatmul.mubr.f32.gmra.mrb[0].mxu0 %v647
        %v851 = vpop.f32.mrb[0].mxu0
        %v852 = vadd.f32 0.0, %v851
        %v853 = vpop.f32.mrb[0].mxu0
        %854 = vmatprep.mubr.f32.mxu0 0.0
        %855 = vmatmul.mubr.f32.gmra.mrb[0].mxu0 %v650
        %v856 = vpop.f32.mrb[0].mxu0
        %v857 = vadd.f32 0.0, %v856
        %v858 = vpop.f32.mrb[0].mxu0
        %859 = vmatprep.mubr.f32.mxu0 0.0
        %860 = vmatmul.mubr.f32.gmra.mrb[0].mxu0 %v653
        %v861 = vpop.f32.mrb[0].mxu0
        %v862 = vadd.f32 0.0, %v861
        %v863 = vpop.f32.mrb[0].mxu0
        %864 = vmatprep.mubr.f32.mxu0 0.0
        %865 = vmatmul.mubr.f32.gmra.mrb[0].mxu0 %v656
        %v866 = vpop.f32.mrb[0].mxu0
        %v867 = vadd.f32 0.0, %v866
        %v868 = vpop.f32.mrb[0].mxu0
        %869 = vmatprep.mubr.f32.mxu0 0.0
        %870 = vmatmul.mubr.f32.gmra.mrb[0].mxu0 %v659
        %v871 = vpop.f32.mrb[0].mxu0
        %v872 = vadd.f32 0.0, %v871
        %v873 = vpop.f32.mrb[0].mxu0
        %874 = vmatprep.mubr.f32.mxu0 0.0
        %875 = vmatmul.mubr.f32.gmra.mrb[0].mxu0 %v662
        %v876 = vpop.f32.mrb[0].mxu0
        %v877 = vadd.f32 0.0, %v876
        %v878 = vpop.f32.mrb[0].mxu0
        %879 = vmatprep.mubr.f32.mxu0 0.0
        %880 = vmatmul.mubr.f32.gmra.mrb[0].mxu0 %v665
        %v881 = vpop.f32.mrb[0].mxu0
        %v882 = vadd.f32 0.0, %v881
        %v883 = vpop.f32.mrb[0].mxu0
        %884 = vmatprep.mubr.f32.mxu0 0.0
        %885 = vmatmul.mubr.f32.gmra.mrb[0].mxu0 %v668
        %v886 = vpop.f32.mrb[0].mxu0
        %v887 = vadd.f32 0.0, %v886
        %v888 = vpop.f32.mrb[0].mxu0
        %889 = vmatprep.mubr.f32.mxu0 0.0
        %890 = vmatmul.mubr.f32.gmra.mrb[0].mxu0 %v671
        %v891 = vpop.f32.mrb[0].mxu0
        %v892 = vadd.f32 0.0, %v891
        %v893 = vpop.f32.mrb[0].mxu0
        %894 = vmatprep.mubr.f32.mxu0 0.0
        %895 = vmatmul.mubr.f32.gmra.mrb[0].mxu0 %v674
        %v896 = vpop.f32.mrb[0].mxu0
        %v897 = vadd.f32 0.0, %v896
        %v898 = vpop.f32.mrb[0].mxu0
        %899 = vmatprep.mubr.f32.mxu0 0.0
        %900 = vmatmul.mubr.f32.gmra.mrb[0].mxu0 %v677
        %v901 = vpop.f32.mrb[0].mxu0
        %v902 = vadd.f32 0.0, %v901
        %v903 = vpop.f32.mrb[0].mxu0
        %904 = vmatprep.mubr.f32.mxu0 0.0
        %905 = vmatmul.mubr.f32.gmra.mrb[0].mxu0 %v680
        %v906 = vpop.f32.mrb[0].mxu0
        %v907 = vadd.f32 0.0, %v906
        %v908 = vpop.f32.mrb[0].mxu0
        %909 = vdwg.mxu0
        %v910 = vmax.f32 %v752, %v792
        %v911 = vmax.f32 %v757, %v797
        %v912 = vmax.f32 %v762, %v802
        %v913 = vmax.f32 %v767, %v807
        %v914 = vmax.f32 %v772, %v812
        %v915 = vmax.f32 %v777, %v817
        %v916 = vmax.f32 %v782, %v822
        %v917 = vmax.f32 %v787, %v827
        %v918 = vmax.f32 %v832, %v872
        %v919 = vmax.f32 %v837, %v877
        %v920 = vmax.f32 %v842, %v882
        %v921 = vmax.f32 %v847, %v887
        %v922 = vmax.f32 %v852, %v892
        %v923 = vmax.f32 %v857, %v897
        %v924 = vmax.f32 %v862, %v902
        %v925 = vmax.f32 %v867, %v907
        %v926 = vmax.f32 %v910, %v918
        %v927 = vmax.f32 %v911, %v919
        %v928 = vmax.f32 %v912, %v920
        %v929 = vmax.f32 %v913, %v921
        %v930 = vmax.f32 %v914, %v922
        %v931 = vmax.f32 %v915, %v923
        %v932 = vmax.f32 %v916, %v924
        %v933 = vmax.f32 %v917, %v925
        %v934 = vld [vmem:[%s6] sm:$0x1]
        %v936 = vlaneseq
        %v937 = vshrl.u32 %v936, 7
        %v938 = vsub.s32 0, %v937
        %v939 = vrot.slane %v934, %v938
        %v941 = vadd.f32 %v926, %v939
        %v942 = vadd.f32 %v927, %v939
        %v943 = vadd.f32 %v928, %v939
        %v944 = vadd.f32 %v929, %v939
        %v945 = vadd.f32 %v930, %v939
        %v946 = vadd.f32 %v931, %v939
        %v947 = vadd.f32 %v932, %v939
        %v948 = vadd.f32 %v933, %v939
        %v949 = vld [vmem:[%s7] sm:$0x3]
        %v950 = vld [vmem:[%s462] sm:$0xff]
        %v952 = vcombine.high %v950, %v950
        %v954 = vsel %vm473, %v949, 0
        %v956 = vsel %vm477, %v950, 0
        %v958 = vsel %vm477, %v952, 0
        %960 = vmatprep.subr.mxu0 %v958
        %961 = vmatpush1.msra.mxu0 %v956
        %962 = vmatprep.subr.mxu0 0.0
        %963 = vmatpush1.msra.mxu0 0.0
        %964 = vmatprep.subr.mxu0 0.0
        %965 = vmatpush1.msra.mxu0 0.0
        %966 = vmatprep.subr.mxu0 0.0
        %967 = vmatpush1.msra.mxu0 0.0
        %968 = vmatprep.subr.mxu0 0.0
        %969 = vmatpush1.msra.mxu0 0.0
        %970 = vmatprep.subr.mxu0 0.0
        %971 = vmatpush1.msra.mxu0 0.0
        %972 = vmatprep.subr.mxu0 0.0
        %973 = vmatpush1.msra.mxu0 0.0
        %974 = vmatprep.subr.mxu0 0.0
        %975 = vmatpush1.msra.mxu0 0.0
        %976 = vmatprep.subr.mxu0 0.0
        %977 = vmatpush1.msra.mxu0 0.0
        %978 = vmatprep.subr.mxu0 0.0
        %979 = vmatpush1.msra.mxu0 0.0
        %980 = vmatprep.subr.mxu0 0.0
        %981 = vmatpush1.msra.mxu0 0.0
        %982 = vmatprep.subr.mxu0 0.0
        %983 = vmatpush1.msra.mxu0 0.0
        %984 = vmatprep.subr.mxu0 0.0
        %985 = vmatpush1.msra.mxu0 0.0
        %986 = vmatprep.subr.mxu0 0.0
        %987 = vmatpush1.msra.mxu0 0.0
        %988 = vmatprep.subr.mxu0 0.0
        %989 = vmatpush1.msra.mxu0 0.0
        %990 = vmatprep.subr.mxu0 0.0
        %991 = vmatpush1.msra.mxu0 0.0
        %992 = vmatprep.subr.mxu0 0.0
        %993 = vmatpush1.msra.mxu0 0.0
        %994 = vmatprep.subr.mxu0 0.0
        %995 = vmatpush1.msra.mxu0 0.0
        %996 = vmatprep.subr.mxu0 0.0
        %997 = vmatpush1.msra.mxu0 0.0
        %998 = vmatprep.subr.mxu0 0.0
        %999 = vmatpush1.msra.mxu0 0.0
        %1000 = vmatprep.subr.mxu0 0.0
        %1001 = vmatpush1.msra.mxu0 0.0
        %1002 = vmatprep.subr.mxu0 0.0
        %1003 = vmatpush1.msra.mxu0 0.0
        %1004 = vmatprep.subr.mxu0 0.0
        %1005 = vmatpush1.msra.mxu0 0.0
        %1006 = vmatprep.subr.mxu0 0.0
        %1007 = vmatpush1.msra.mxu0 0.0
        %1008 = vmatprep.subr.mxu0 0.0
        %1009 = vmatpush1.msra.mxu0 0.0
        %1010 = vmatprep.subr.mxu0 0.0
        %1011 = vmatpush1.msra.mxu0 0.0
        %1012 = vmatprep.subr.mxu0 0.0
        %1013 = vmatpush1.msra.mxu0 0.0
        %1014 = vmatprep.subr.mxu0 0.0
        %1015 = vmatpush1.msra.mxu0 0.0
        %1016 = vmatprep.subr.mxu0 0.0
        %1017 = vmatpush1.msra.mxu0 0.0
        %1018 = vmatprep.subr.mxu0 0.0
        %1019 = vmatpush1.msra.mxu0 0.0
        %1020 = vmatprep.subr.mxu0 0.0
        %1021 = vmatpush1.msra.mxu0 0.0
        %1022 = vmatprep.subr.mxu0 0.0
        %1023 = vmatpush1.msra.mxu0 0.0
        %1024 = vmatprep.mubr.f32.mxu0 0.0
        %1025 = vmatmul.mubr.f32.gmra.mrb[0].mxu0 %v954
        %v1026 = vpop.f32.mrb[0].mxu0
        %v1027 = vadd.f32 0.0, %v1026
        %v1028 = vpop.f32.mrb[0].mxu0
        %v1029 = vadd.f32 0.0, %v1028
        %1030 = vdwg.mxu0
        %1032 = vrot.lane.b32.xlu0 %v1027, 64
        %v1033 = vpop.permute.xlu0 %1032
        %v1035 = vmax.f32 %v1027, %v1033
        %1037 = vrot.lane.b32.xlu0 %v1029, 64
        %v1038 = vpop.permute.xlu0 %1037
        %v1040 = vmax.f32 %v1029, %v1038
        %v1041 = vmax.f32 %v1035, %v1040
        %v1042 = vld [vmem:[%s8] sm:$0x3]
        %1044 = vset.pattern.permute.xlu0 0
        %1045 = vperm.xlu0 %1044, %v1042
        %v1046 = vpop.permute.xlu0 %1045
        %v1048 = vadd.f32 %v1041, %v1046
        %vm1049 = vcmask 15360
        %v1051 = vsel %vm1049, %v941, 0
        %v1054 = vsel %vm1049, %v942, 0
        %v1057 = vsel %vm1049, %v943, 0
        %v1060 = vsel %vm1049, %v944, 0
        %v1063 = vsel %vm1049, %v945, 0
        %v1066 = vsel %vm1049, %v946, 0
        %v1069 = vsel %vm1049, %v947, 0
        %v1072 = vsel %vm1049, %v948, 0
        %vm1074 = vcmask 1041408
        %v1076 = vsel %vm1074, %v549, 0
        %v1079 = vsel %vm1074, %v551, 0
        %1081 = vmatprep.subr.mxu0 %v1079
        %1082 = vmatpush1.msra.mxu0 %v1076
        %1083 = vmatprep.subr.mxu0 0.0
        %1084 = vmatpush1.msra.mxu0 0.0
        %1085 = vmatprep.subr.mxu0 0.0
        %1086 = vmatpush1.msra.mxu0 0.0
        %1087 = vmatprep.subr.mxu0 0.0
        %1088 = vmatpush1.msra.mxu0 0.0
        %1089 = vmatprep.subr.mxu0 0.0
        %1090 = vmatpush1.msra.mxu0 0.0
        %1091 = vmatprep.subr.mxu0 0.0
        %1092 = vmatpush1.msra.mxu0 0.0
        %1093 = vmatprep.subr.mxu0 0.0
        %1094 = vmatpush1.msra.mxu0 0.0
        %1095 = vmatprep.subr.mxu0 0.0
        %1096 = vmatpush1.msra.mxu0 0.0
        %1097 = vmatprep.subr.mxu0 0.0
        %1098 = vmatpush1.msra.mxu0 0.0
        %1099 = vmatprep.subr.mxu0 0.0
        %1100 = vmatpush1.msra.mxu0 0.0
        %1101 = vmatprep.subr.mxu0 0.0
        %1102 = vmatpush1.msra.mxu0 0.0
        %1103 = vmatprep.subr.mxu0 0.0
        %1104 = vmatpush1.msra.mxu0 0.0
        %1105 = vmatprep.subr.mxu0 0.0
        %1106 = vmatpush1.msra.mxu0 0.0
        %1107 = vmatprep.subr.mxu0 0.0
        %1108 = vmatpush1.msra.mxu0 0.0
        %1109 = vmatprep.subr.mxu0 0.0
        %1110 = vmatpush1.msra.mxu0 0.0
        %1111 = vmatprep.subr.mxu0 0.0
        %1112 = vmatpush1.msra.mxu0 0.0
        %1113 = vmatprep.subr.mxu0 0.0
        %1114 = vmatpush1.msra.mxu0 0.0
        %1115 = vmatprep.subr.mxu0 0.0
        %1116 = vmatpush1.msra.mxu0 0.0
        %1117 = vmatprep.subr.mxu0 0.0
        %1118 = vmatpush1.msra.mxu0 0.0
        %1119 = vmatprep.subr.mxu0 0.0
        %1120 = vmatpush1.msra.mxu0 0.0
        %1121 = vmatprep.subr.mxu0 0.0
        %1122 = vmatpush1.msra.mxu0 0.0
        %1123 = vmatprep.subr.mxu0 0.0
        %1124 = vmatpush1.msra.mxu0 0.0
        %1125 = vmatprep.subr.mxu0 0.0
        %1126 = vmatpush1.msra.mxu0 0.0
        %1127 = vmatprep.subr.mxu0 0.0
        %1128 = vmatpush1.msra.mxu0 0.0
        %1129 = vmatprep.subr.mxu0 0.0
        %1130 = vmatpush1.msra.mxu0 0.0
        %1131 = vmatprep.subr.mxu0 0.0
        %1132 = vmatpush1.msra.mxu0 0.0
        %1133 = vmatprep.subr.mxu0 0.0
        %1134 = vmatpush1.msra.mxu0 0.0
        %1135 = vmatprep.subr.mxu0 0.0
        %1136 = vmatpush1.msra.mxu0 0.0
        %1137 = vmatprep.subr.mxu0 0.0
        %1138 = vmatpush1.msra.mxu0 0.0
        %1139 = vmatprep.subr.mxu0 0.0
        %1140 = vmatpush1.msra.mxu0 0.0
        %1141 = vmatprep.subr.mxu0 0.0
        %1142 = vmatpush1.msra.mxu0 0.0
        %1143 = vmatprep.subr.mxu0 0.0
        %1144 = vmatpush1.msra.mxu0 0.0
        %1145 = vmatprep.mubr.f32.mxu0 0.0
        %1146 = vmatmul.mubr.f32.gmra.mrb[0].mxu0 %v1051
        %v1147 = vpop.f32.mrb[0].mxu0
        %v1148 = vadd.f32 0.0, %v1147
        %v1149 = vpop.f32.mrb[0].mxu0
        %v1150 = vadd.f32 0.0, %v1149
        %1151 = vmatprep.mubr.f32.mxu0 0.0
        %1152 = vmatmul.mubr.f32.gmra.mrb[0].mxu0 %v1054
        %v1153 = vpop.f32.mrb[0].mxu0
        %v1154 = vadd.f32 0.0, %v1153
        %v1155 = vpop.f32.mrb[0].mxu0
        %v1156 = vadd.f32 0.0, %v1155
        %1157 = vmatprep.mubr.f32.mxu0 0.0
        %1158 = vmatmul.mubr.f32.gmra.mrb[0].mxu0 %v1057
        %v1159 = vpop.f32.mrb[0].mxu0
        %v1160 = vadd.f32 0.0, %v1159
        %v1161 = vpop.f32.mrb[0].mxu0
        %v1162 = vadd.f32 0.0, %v1161
        %1163 = vmatprep.mubr.f32.mxu0 0.0
        %1164 = vmatmul.mubr.f32.gmra.mrb[0].mxu0 %v1060
        %v1165 = vpop.f32.mrb[0].mxu0
        %v1166 = vadd.f32 0.0, %v1165
        %v1167 = vpop.f32.mrb[0].mxu0
        %v1168 = vadd.f32 0.0, %v1167
        %1169 = vmatprep.mubr.f32.mxu0 0.0
        %1170 = vmatmul.mubr.f32.gmra.mrb[0].mxu0 %v1063
        %v1171 = vpop.f32.mrb[0].mxu0
        %v1172 = vadd.f32 0.0, %v1171
        %v1173 = vpop.f32.mrb[0].mxu0
        %v1174 = vadd.f32 0.0, %v1173
        %1175 = vmatprep.mubr.f32.mxu0 0.0
        %1176 = vmatmul.mubr.f32.gmra.mrb[0].mxu0 %v1066
        %v1177 = vpop.f32.mrb[0].mxu0
        %v1178 = vadd.f32 0.0, %v1177
        %v1179 = vpop.f32.mrb[0].mxu0
        %v1180 = vadd.f32 0.0, %v1179
        %1181 = vmatprep.mubr.f32.mxu0 0.0
        %1182 = vmatmul.mubr.f32.gmra.mrb[0].mxu0 %v1069
        %v1183 = vpop.f32.mrb[0].mxu0
        %v1184 = vadd.f32 0.0, %v1183
        %v1185 = vpop.f32.mrb[0].mxu0
        %v1186 = vadd.f32 0.0, %v1185
        %1187 = vmatprep.mubr.f32.mxu0 0.0
        %1188 = vmatmul.mubr.f32.gmra.mrb[0].mxu0 %v1072
        %v1189 = vpop.f32.mrb[0].mxu0
        %v1190 = vadd.f32 0.0, %v1189
        %v1191 = vpop.f32.mrb[0].mxu0
        %v1192 = vadd.f32 0.0, %v1191
        %1193 = vdwg.mxu0
        %vm1194 = vcmask 523264
        %v1196 = vsel %vm1194, %v1048, 0
        %1198 = vmatprep.subr.mxu0 %v1150
        %1199 = vmatpush1.msra.mxu0 %v1148
        %1200 = vmatprep.subr.mxu0 %v1156
        %1201 = vmatpush1.msra.mxu0 %v1154
        %1202 = vmatprep.subr.mxu0 %v1162
        %1203 = vmatpush1.msra.mxu0 %v1160
        %1204 = vmatprep.subr.mxu0 %v1168
        %1205 = vmatpush1.msra.mxu0 %v1166
        %1206 = vmatprep.subr.mxu0 %v1174
        %1207 = vmatpush1.msra.mxu0 %v1172
        %1208 = vmatprep.subr.mxu0 %v1180
        %1209 = vmatpush1.msra.mxu0 %v1178
        %1210 = vmatprep.subr.mxu0 %v1186
        %1211 = vmatpush1.msra.mxu0 %v1184
        %1212 = vmatprep.subr.mxu0 %v1192
        %1213 = vmatpush1.msra.mxu0 %v1190
        %1214 = vmatprep.subr.mxu0 0.0
        %1215 = vmatpush1.msra.mxu0 0.0
        %1216 = vmatprep.subr.mxu0 0.0
        %1217 = vmatpush1.msra.mxu0 0.0
        %1218 = vmatprep.subr.mxu0 0.0
        %1219 = vmatpush1.msra.mxu0 0.0
        %1220 = vmatprep.subr.mxu0 0.0
        %1221 = vmatpush1.msra.mxu0 0.0
        %1222 = vmatprep.subr.mxu0 0.0
        %1223 = vmatpush1.msra.mxu0 0.0
        %1224 = vmatprep.subr.mxu0 0.0
        %1225 = vmatpush1.msra.mxu0 0.0
        %1226 = vmatprep.subr.mxu0 0.0
        %1227 = vmatpush1.msra.mxu0 0.0
        %1228 = vmatprep.subr.mxu0 0.0
        %1229 = vmatpush1.msra.mxu0 0.0
        %1230 = vmatprep.subr.mxu0 0.0
        %1231 = vmatpush1.msra.mxu0 0.0
        %1232 = vmatprep.subr.mxu0 0.0
        %1233 = vmatpush1.msra.mxu0 0.0
        %1234 = vmatprep.subr.mxu0 0.0
        %1235 = vmatpush1.msra.mxu0 0.0
        %1236 = vmatprep.subr.mxu0 0.0
        %1237 = vmatpush1.msra.mxu0 0.0
        %1238 = vmatprep.subr.mxu0 0.0
        %1239 = vmatpush1.msra.mxu0 0.0
        %1240 = vmatprep.subr.mxu0 0.0
        %1241 = vmatpush1.msra.mxu0 0.0
        %1242 = vmatprep.subr.mxu0 0.0
        %1243 = vmatpush1.msra.mxu0 0.0
        %1244 = vmatprep.subr.mxu0 0.0
        %1245 = vmatpush1.msra.mxu0 0.0
        %1246 = vmatprep.subr.mxu0 0.0
        %1247 = vmatpush1.msra.mxu0 0.0
        %1248 = vmatprep.subr.mxu0 0.0
        %1249 = vmatpush1.msra.mxu0 0.0
        %1250 = vmatprep.subr.mxu0 0.0
        %1251 = vmatpush1.msra.mxu0 0.0
        %1252 = vmatprep.subr.mxu0 0.0
        %1253 = vmatpush1.msra.mxu0 0.0
        %1254 = vmatprep.subr.mxu0 0.0
        %1255 = vmatpush1.msra.mxu0 0.0
        %1256 = vmatprep.subr.mxu0 0.0
        %1257 = vmatpush1.msra.mxu0 0.0
        %1258 = vmatprep.subr.mxu0 0.0
        %1259 = vmatpush1.msra.mxu0 0.0
        %1260 = vmatprep.subr.mxu0 0.0
        %1261 = vmatpush1.msra.mxu0 0.0
        %1262 = vmatprep.mubr.f32.mxu0 0.0
        %1263 = vmatmul.mubr.f32.gmra.mrb[0].mxu0 %v1196
        %v1264 = vpop.f32.mrb[0].mxu0
        %v1265 = vadd.f32 0.0, %v1264
        %v1266 = vpop.f32.mrb[0].mxu0
        %v1267 = vadd.f32 0.0, %v1266
        %1268 = vdwg.mxu0
        %v1269 = vld [vmem:[%s9] sm:$0xf]
        %v1270 = vld [vmem:[%s10] sm:$0xf]
        %1272 = vset.pattern.permute.xlu0 0
        %1273 = vperm.xlu0 %1272, %v1270
        %v1274 = vpop.permute.xlu0 %1273
        %v1277 = vsel %vm1049, %v1269, 0
        %v1280 = vsel %vm1074, %v1265, 0
        %v1283 = vsel %vm1074, %v1267, 0
        %1285 = vmatprep.subr.mxu0 %v1283
        %1286 = vmatpush1.msra.mxu0 %v1280
        %1287 = vmatprep.subr.mxu0 0.0
        %1288 = vmatpush1.msra.mxu0 0.0
        %1289 = vmatprep.subr.mxu0 0.0
        %1290 = vmatpush1.msra.mxu0 0.0
        %1291 = vmatprep.subr.mxu0 0.0
        %1292 = vmatpush1.msra.mxu0 0.0
        %1293 = vmatprep.subr.mxu0 0.0
        %1294 = vmatpush1.msra.mxu0 0.0
        %1295 = vmatprep.subr.mxu0 0.0
        %1296 = vmatpush1.msra.mxu0 0.0
        %1297 = vmatprep.subr.mxu0 0.0
        %1298 = vmatpush1.msra.mxu0 0.0
        %1299 = vmatprep.subr.mxu0 0.0
        %1300 = vmatpush1.msra.mxu0 0.0
        %1301 = vmatprep.subr.mxu0 0.0
        %1302 = vmatpush1.msra.mxu0 0.0
        %1303 = vmatprep.subr.mxu0 0.0
        %1304 = vmatpush1.msra.mxu0 0.0
        %1305 = vmatprep.subr.mxu0 0.0
        %1306 = vmatpush1.msra.mxu0 0.0
        %1307 = vmatprep.subr.mxu0 0.0
        %1308 = vmatpush1.msra.mxu0 0.0
        %1309 = vmatprep.subr.mxu0 0.0
        %1310 = vmatpush1.msra.mxu0 0.0
        %1311 = vmatprep.subr.mxu0 0.0
        %1312 = vmatpush1.msra.mxu0 0.0
        %1313 = vmatprep.subr.mxu0 0.0
        %1314 = vmatpush1.msra.mxu0 0.0
        %1315 = vmatprep.subr.mxu0 0.0
        %1316 = vmatpush1.msra.mxu0 0.0
        %1317 = vmatprep.subr.mxu0 0.0
        %1318 = vmatpush1.msra.mxu0 0.0
        %1319 = vmatprep.subr.mxu0 0.0
        %1320 = vmatpush1.msra.mxu0 0.0
        %1321 = vmatprep.subr.mxu0 0.0
        %1322 = vmatpush1.msra.mxu0 0.0
        %1323 = vmatprep.subr.mxu0 0.0
        %1324 = vmatpush1.msra.mxu0 0.0
        %1325 = vmatprep.subr.mxu0 0.0
        %1326 = vmatpush1.msra.mxu0 0.0
        %1327 = vmatprep.subr.mxu0 0.0
        %1328 = vmatpush1.msra.mxu0 0.0
        %1329 = vmatprep.subr.mxu0 0.0
        %1330 = vmatpush1.msra.mxu0 0.0
        %1331 = vmatprep.subr.mxu0 0.0
        %1332 = vmatpush1.msra.mxu0 0.0
        %1333 = vmatprep.subr.mxu0 0.0
        %1334 = vmatpush1.msra.mxu0 0.0
        %1335 = vmatprep.subr.mxu0 0.0
        %1336 = vmatpush1.msra.mxu0 0.0
        %1337 = vmatprep.subr.mxu0 0.0
        %1338 = vmatpush1.msra.mxu0 0.0
        %1339 = vmatprep.subr.mxu0 0.0
        %1340 = vmatpush1.msra.mxu0 0.0
        %1341 = vmatprep.subr.mxu0 0.0
        %1342 = vmatpush1.msra.mxu0 0.0
        %1343 = vmatprep.subr.mxu0 0.0
        %1344 = vmatpush1.msra.mxu0 0.0
        %1345 = vmatprep.subr.mxu0 0.0
        %1346 = vmatpush1.msra.mxu0 0.0
        %1347 = vmatprep.subr.mxu0 0.0
        %1348 = vmatpush1.msra.mxu0 0.0
        %1349 = vmatprep.mubr.f32.mxu0 0.0
        %1350 = vmatmul.mubr.f32.gmra.mrb[0].mxu0 %v1277
        %v1351 = vpop.f32.mrb[0].mxu0
        %v1352 = vadd.f32 %v1274, %v1351
        %v1353 = vpop.f32.mrb[0].mxu0
        %v1354 = vadd.f32 %v1274, %v1353
        %1355 = vdwg.mxu0
        %v1357 = vadd.f32 %v1352, %v463
        %v1358 = vadd.f32 %v1354, %v472
        %v1361 = vcombine.low %v1357, %v1358
        %1363 = vst [vmem:[%s440] sm:$0xff] %v1361
        %v1364 = vcombine.low %v1265, %v1267
        %v1366 = vunpack.c.l.s4 1983009808
        %v1367 = vunpack.c.0.s8 %v1366
        %v1368 = vlaneseq
        %v1369 = vshrl.u32 %v1368, 7
        %v1370 = vsub.s32 %v1367, %v1369
        %v1371 = vrot.slane %v1364, %v1370
        %1373 = vst [vmem:[%s447] sm:$0xf] %v1371
        %s1374 = sand.u32 %s284, 1
        %s1375 = scalar_lea.sflag [#allocation3], %s1374
        %s1376 = sand.u32 %s284, 1
        %s1377 = smul.addr %s1376, 8
        %s1378 = scalar_lea.vmem [#allocation2], %s1377
        %s1379 = sand.u32 %s310, 1
        %s1380 = scalar_lea.sflag [#allocation5], %s1379
        %s1381 = sand.u32 %s310, 1
        %s1382 = smul.addr %s1381, 4
        %s1383 = scalar_lea.vmem [#allocation4], %s1382
        // Predicated region
        $region65: #{tpu_custom_call.1} parent=63 // pred_check
          %p1384 = pneg %p294
        $region66: #{tpu_custom_call.1} parent=63 // pred_check_branch
          %1386 = sbr.rel (%p1384) target = $region68
        $region67: #{tpu_custom_call.1} parent=63 // pred_region
          %s1388 = ssub.s32 128, 128
          %1389 = vsyncadd %s1375, %s1388
          %s1390 = smul.addr %s30, 2
          %s1391 = smul.addr %s1390, 64
          %s1392 = scalar_lea.hbm %s11, %s1391
          %s1394 = sshll.u32 %s1378, 4
          %s1395 = int_to_ptr.vmem [resolvable:$true] %s1394
          %1397 = dma.vmem_to_hbm [thread:$0]  %s1395, 128, %s1392, %s1375
        $region68: #{tpu_custom_call.1} parent=63 // pred_fallthru
          _
        // Predicated region
        $region69: #{tpu_custom_call.1} parent=63 // pred_check
          %p1398 = pneg %p320
        $region70: #{tpu_custom_call.1} parent=63 // pred_check_branch
          %1400 = sbr.rel (%p1398) target = $region72
        $region71: #{tpu_custom_call.1} parent=63 // pred_region
          %s1402 = ssub.s32 64, 64
          %1403 = vsyncadd %s1380, %s1402
          %s1404 = smul.addr %s30, 2
          %s1405 = smul.addr %s1404, 32
          %s1406 = scalar_lea.hbm %s12, %s1405
          %s1408 = sshll.u32 %s1383, 4
          %s1409 = int_to_ptr.vmem [resolvable:$true] %s1408
          %1411 = dma.vmem_to_hbm [thread:$0]  %s1409, 64, %s1406, %s1380
        $region72: #{tpu_custom_call.1} parent=63 // pred_fallthru
          _
      $region64: #{tpu_custom_call.1} parent=5 // pred_fallthru
        _
      %p1412 = scmp.le.s32.totalorder 2, %s25
      // Predicated region
      $region73: #{tpu_custom_call.1} parent=5 // pred_check
        %p1413 = pneg %p1412
      $region74: #{tpu_custom_call.1} parent=5 // pred_check_branch
        %1415 = sbr.rel (%p1413) target = $region76
      $region75: #{tpu_custom_call.1} parent=5 // pred_region
        %s1416 = ssub.s32 %s25, 2
        // Predicated region
        $region77: #{tpu_custom_call.1} parent=75 // pred_check
          %p1417 = pneg %p300
        $region78: #{tpu_custom_call.1} parent=75 // pred_check_branch
          %1419 = sbr.rel (%p1417) target = $region80
        $region79: #{tpu_custom_call.1} parent=75 // pred_region
          %s1420 = sand.u32 %s285, 1
          %s1421 = scalar_lea.sflag [#allocation3], %s1420
          %s1422 = sand.u32 %s285, 1
          %s1423 = smul.addr %s1422, 8
          %s1424 = scalar_lea.vmem [#allocation2], %s1423
          %1425 = dma.done %s1421, 128
        $region80: #{tpu_custom_call.1} parent=75 // pred_fallthru
          _
        // Predicated region
        $region81: #{tpu_custom_call.1} parent=75 // pred_check
          %p1426 = pneg %p326
        $region82: #{tpu_custom_call.1} parent=75 // pred_check_branch
          %1428 = sbr.rel (%p1426) target = $region84
        $region83: #{tpu_custom_call.1} parent=75 // pred_region
          %s1429 = sand.u32 %s311, 1
          %s1430 = scalar_lea.sflag [#allocation5], %s1429
          %s1431 = sand.u32 %s311, 1
          %s1432 = smul.addr %s1431, 4
          %s1433 = scalar_lea.vmem [#allocation4], %s1432
          %1434 = dma.done %s1430, 64
        $region84: #{tpu_custom_call.1} parent=75 // pred_fallthru
          _
      $region76: #{tpu_custom_call.1} parent=5 // pred_fallthru
        _
    $region6: #{tpu_custom_call.1} parent=1 // loop_footer
      %s29 = sadd.s32 1, %s25
    $region7: #{tpu_custom_call.1} parent=1 // loop_footer_branch
      %24 = sbr.rel target = $region3
    $region8: #{tpu_custom_call.1} parent=1 // loop_exit
      _
    %1435 = vsyncpa [#allocation3], 1
    %s1436 = scalar_lea.sflag [#allocation3], 1
    %1437 = vsyncpa %s1436, 1
    %1438 = vsyncpa [#allocation5], 1
    %s1439 = scalar_lea.sflag [#allocation5], 1
    %1440 = vsyncpa %s1439, 1

</llo_original>
